<compile_context>
chip_gen: v7x
topology: tpu7x:2x2x1
jax: 0.10.0
libtpu: 0.0.40
codegen_flags: <defaults>
</compile_context>

<pallas_src>
import numpy as np
import jax
import jax.numpy as jnp
from jax.experimental import pallas as pl
from jax.experimental.pallas import tpu as pltpu


# ---------------------------------------------------------------------------
# Pallas kernels
# ---------------------------------------------------------------------------

def _fwd_dft_amp_kernel(flr_ref, fli_ref, frr_ref, fri_ref, x_ref,
                        re_ref, im_ref, amp_ref):
    """Fused fftshift(fft2(x)) + amplitude for a block of G real images.

    S = FL @ x @ FR, where FL/FR already contain the fftshift row/column rolls.
    """
    g, h, w = x_ref.shape
    frr = frr_ref[...]
    fri = fri_ref[...]
    flr = flr_ref[...]
    fli = fli_ref[...]

    # Stage 1: row transform (contraction over W) as one big lane-dense matmul.
    xa = x_ref[...].reshape(g * h, w)                    # real input
    tr = jnp.dot(xa, frr, preferred_element_type=jnp.float32)
    ti = jnp.dot(xa, fri, preferred_element_type=jnp.float32)
    tr = tr.reshape(g, h, w)
    ti = ti.reshape(g, h, w)

    # Stage 2: column transform per image (contraction over H), all in VMEM.
    # g is small (<= 8); this static loop is unrolled at trace time.
    for i in range(g):
        trg = tr[i]
        tig = ti[i]
        sr = (jnp.dot(flr, trg, preferred_element_type=jnp.float32)
              - jnp.dot(fli, tig, preferred_element_type=jnp.float32))
        si = (jnp.dot(flr, tig, preferred_element_type=jnp.float32)
              + jnp.dot(fli, trg, preferred_element_type=jnp.float32))
        re_ref[i] = sr
        im_ref[i] = si
        amp_ref[i] = jnp.sqrt(sr * sr + si * si)         # torch.abs of the FFT


def _mask_idft_kernel(glr_ref, gli_ref, grr_ref, gri_ref, m_ref, re_ref, im_ref,
                      mb_ref, xm_ref):
    """Fused binary-mask apply + real(ifft2(ifftshift(.))) for G images.

    mask_binary = sign(mask - 0.5).clamp(min=0) == (mask > 0.5)
    x_masked = Re(GL @ (mb * Z) @ GR), with GL/GR absorbing the ifftshift.
    """
    g, h, w = m_ref.shape
    grr = grr_ref[...]
    gri = gri_ref[...]
    glr = glr_ref[...]
    gli = gli_ref[...]

    m = m_ref[...]
    mb = (m > 0.5).astype(jnp.float32)
    mb_ref[...] = mb

    zr = (mb * re_ref[...]).reshape(g * h, w)
    zi = (mb * im_ref[...]).reshape(g * h, w)

    # Stage 1: (masked spectrum) @ GR, flattened over the group (lane-dense).
    tr = (jnp.dot(zr, grr, preferred_element_type=jnp.float32)
          - jnp.dot(zi, gri, preferred_element_type=jnp.float32))
    ti = (jnp.dot(zr, gri, preferred_element_type=jnp.float32)
          + jnp.dot(zi, grr, preferred_element_type=jnp.float32))
    tr = tr.reshape(g, h, w)
    ti = ti.reshape(g, h, w)

    # Stage 2: GL @ T per image; only the real part is needed.
    for i in range(g):
        xm_ref[i] = (jnp.dot(glr, tr[i], preferred_element_type=jnp.float32)
                     - jnp.dot(gli, ti[i], preferred_element_type=jnp.float32))


# ---------------------------------------------------------------------------
# Pallas wrappers
# ---------------------------------------------------------------------------

_VMEM_LIMIT = 32 * 1024 * 1024


def _pick_group(bc, h, w, budget_bytes=1 << 20, max_group=8):
    """Largest divisor of bc with per-plane block <= budget and grid >= 2."""
    best = 1
    for g in range(1, min(bc, max_group) + 1):
        if bc % g != 0:
            continue
        if g * h * w * 4 > budget_bytes:
            continue
        if bc // g >= 2 or (bc == 1 and g == 1):
            best = g
    return best


def pallas_fwd_dft_amp(x3, flr, fli, frr, fri, group):
    bc, h, w = x3.shape
    assert bc % group == 0
    img_spec = pl.BlockSpec((group, h, w), lambda i: (i, 0, 0))
    mat_spec = pl.BlockSpec((h, h), lambda i: (0, 0))
    out = jax.ShapeDtypeStruct((bc, h, w), jnp.float32)
    return pl.pallas_call(
        _fwd_dft_amp_kernel,
        out_shape=(out, out, out),
        grid_spec=pltpu.PrefetchScalarGridSpec(
            num_scalar_prefetch=0,
            grid=(bc // group,),
            in_specs=[mat_spec, mat_spec, mat_spec, mat_spec, img_spec],
            out_specs=(img_spec, img_spec, img_spec)),
        compiler_params=pltpu.CompilerParams(
            dimension_semantics=("parallel",),
            vmem_limit_bytes=_VMEM_LIMIT),
    )(flr, fli, frr, fri, x3)


def pallas_mask_idft(mask3, re, im, glr, gli, grr, gri, group):
    bc, h, w = mask3.shape
    assert bc % group == 0
    img_spec = pl.BlockSpec((group, h, w), lambda i: (i, 0, 0))
    mat_spec = pl.BlockSpec((h, h), lambda i: (0, 0))
    out = jax.ShapeDtypeStruct((bc, h, w), jnp.float32)
    return pl.pallas_call(
        _mask_idft_kernel,
        out_shape=(out, out),
        grid_spec=pltpu.PrefetchScalarGridSpec(
            num_scalar_prefetch=0,
            grid=(bc // group,),
            in_specs=[mat_spec, mat_spec, mat_spec, mat_spec,
                      img_spec, img_spec, img_spec],
            out_specs=(img_spec, img_spec)),
        compiler_params=pltpu.CompilerParams(
            dimension_semantics=("parallel",),
            vmem_limit_bytes=_VMEM_LIMIT),
    )(glr, gli, grr, gri, mask3, re, im)


# ---------------------------------------------------------------------------
# DFT matrices with fftshift / ifftshift absorbed (even n only)
# ---------------------------------------------------------------------------

def shifted_dft_matrices(n):
    """Returns (FLr, FLi, FRr, FRi, GLr, GLi, GRr, GRi) such that
       fftshift(fft2(x))            == FL @ x @ FR
       real(ifft2(ifftshift(Z)))    == Re(GL @ Z @ GR)
    for even n (square images)."""
    k = np.arange(n)
    ang = -2.0 * np.pi * np.outer(k, k) / n
    fr = np.cos(ang)
    fi = np.sin(ang)                      # F = exp(-2*pi*i*k*h/n), symmetric
    gr = np.cos(ang) / n                  # G = conj(F) / n, symmetric
    gi = -np.sin(ang) / n
    s = n // 2
    mats = (np.roll(fr, s, axis=0), np.roll(fi, s, axis=0),   # FL
            np.roll(fr, s, axis=1), np.roll(fi, s, axis=1),   # FR
            np.roll(gr, s, axis=1), np.roll(gi, s, axis=1),   # GL
            np.roll(gr, s, axis=0), np.roll(gi, s, axis=0))   # GR
    return tuple(jnp.asarray(m, jnp.float32) for m in mats)


# ---------------------------------------------------------------------------
# FRAE proxy (XLA native conv) and full TRN forward
# ---------------------------------------------------------------------------

def conv3x3(x, w, b, act):
    y = jax.lax.conv_general_dilated(
        x, w, window_strides=(1, 1), padding="SAME",
        dimension_numbers=("NCHW", "OIHW", "NCHW"))
    y = y + b[None, :, None, None]
    if act == "silu":
        return y * jax.nn.sigmoid(y)
    if act == "sigmoid":
        return jax.nn.sigmoid(y)
    return y


def frae_forward(p, x):
    h = conv3x3(x, p["w1"], p["b1"], act="silu")
    return conv3x3(h, p["w2"], p["b2"], act="sigmoid")


def init_frae_params(key, ch_in, bs_channel):
    k1, k2, k3, k4 = jax.random.split(key, 4)
    s1 = 1.0 / np.sqrt(ch_in * 9)
    s2 = 1.0 / np.sqrt(bs_channel * 9)
    return {
        "w1": jax.random.normal(k1, (bs_channel, ch_in, 3, 3), jnp.float32) * s1,
        "b1": jax.random.normal(k2, (bs_channel,), jnp.float32) * 0.01,
        "w2": jax.random.normal(k3, (ch_in, bs_channel, 3, 3), jnp.float32) * s2,
        "b2": jax.random.normal(k4, (ch_in,), jnp.float32) * 0.01,
    }


def trn_forward(params, x):
    B, C, H, W = x.shape
    assert H == W, "TRN kernels assume square resolution"
    assert H % 8 == 0, "resolution must be a multiple of 8 (TPU sublane tiling)"
    bc = B * C
    mats = shifted_dft_matrices(H)
    group = _pick_group(bc, H, W)
    x3 = x.reshape(bc, H, W)

    # fftshift(fft2(x)) and amplitude in one fused kernel.
    re, im, amp = pallas_fwd_dft_amp(x3, mats[0], mats[1], mats[2], mats[3], group)

    # amplitude -> mask_gen (FRAE proxy)
    mask = frae_forward(params["mask_gen"], amp.reshape(B, C, H, W))

    # binary mask + masked spectrum + real(ifft2(ifftshift(.))) fused.
    mask_bin, x_masked = pallas_mask_idft(mask.reshape(bc, H, W), re, im,
                                          mats[4], mats[5], mats[6], mats[7],
                                          group)

    x_rec = frae_forward(params["recover"], x_masked.reshape(B, C, H, W))
    return x_rec, mask_bin.reshape(B, C, H, W)


# ---------------------------------------------------------------------------
if __name__ == "__main__":
    B, C, H, W = 2, 3, 16, 16            # ch_in=3, small resolution
    bs_channel = 8

    key = jax.random.PRNGKey(0)
    kx, kp1, kp2 = jax.random.split(key, 3)
    x = jax.random.normal(kx, (B, C, H, W), jnp.float32)
    params = {
        "mask_gen": init_frae_params(kp1, C, bs_channel),
        "recover": init_frae_params(kp2, C, bs_channel),
    }

    # --- unit checks of the two Pallas kernels against jnp.fft ---------------
    bc = B * C
    x3 = x.reshape(bc, H, W)
    mats = shifted_dft_matrices(H)
    grp = _pick_group(bc, H, W)

    re, im, amp = pallas_fwd_dft_amp(x3, mats[0], mats[1], mats[2], mats[3], grp)
    jax.block_until_ready((re, im, amp))
    ref_spec = jnp.fft.fftshift(jnp.fft.fft2(x3), axes=(-2, -1))
    scale = jnp.max(jnp.abs(ref_spec)) + 1e-6
    err_fwd = jnp.max(jnp.abs((re + 1j * im) - ref_spec)) / scale
    assert float(err_fwd) < 2e-2, f"forward DFT mismatch: {float(err_fwd)}"
    err_amp = jnp.max(jnp.abs(amp - jnp.abs(ref_spec))) / scale
    assert float(err_amp) < 2e-2, f"amplitude mismatch: {float(err_amp)}"

    mtest = jax.random.uniform(jax.random.PRNGKey(1), (bc, H, W), jnp.float32)
    mb_p, xm_p = pallas_mask_idft(mtest, re, im, mats[4], mats[5], mats[6],
                                  mats[7], grp)
    jax.block_until_ready((mb_p, xm_p))
    mb_ref = (mtest > 0.5).astype(jnp.float32)
    z_ref = mb_ref * re + 1j * (mb_ref * im)
    xm_ref = jnp.real(jnp.fft.ifft2(jnp.fft.ifftshift(z_ref, axes=(-2, -1))))
    scale2 = jnp.max(jnp.abs(xm_ref)) + 1e-6
    err_inv = jnp.max(jnp.abs(xm_p - xm_ref)) / scale2
    assert float(err_inv) < 2e-2, f"inverse DFT mismatch: {float(err_inv)}"
    assert bool(jnp.all(mb_p == mb_ref)), "binary mask mismatch"

    # --- full forward ---------------------------------------------------------
    x_rec, mask_bin = jax.jit(trn_forward)(params, x)
    jax.block_until_ready((x_rec, mask_bin))
    assert x_rec.shape == (B, C, H, W)
    assert mask_bin.shape == (B, C, H, W)
    assert bool(jnp.all(jnp.isfinite(x_rec)))
    assert bool(jnp.all((mask_bin == 0.0) | (mask_bin == 1.0)))
    print("KERNEL_OK")
</pallas_src>

<mosaic_0001>
module attributes {stable_mosaic.version = 11 : i64} {
  func.func @_fwd_dft_amp_kernel(%arg0: i32, %arg1: memref<16x16xf32, #tpu.memory_space<vmem>>, %arg2: memref<16x16xf32, #tpu.memory_space<vmem>>, %arg3: memref<16x16xf32, #tpu.memory_space<vmem>>, %arg4: memref<16x16xf32, #tpu.memory_space<vmem>>, %arg5: memref<3x16x16xf32, #tpu.memory_space<vmem>>, %arg6: memref<3x16x16xf32, #tpu.memory_space<vmem>>, %arg7: memref<3x16x16xf32, #tpu.memory_space<vmem>>, %arg8: memref<3x16x16xf32, #tpu.memory_space<vmem>>) attributes {dimension_semantics = [#tpu.dimension_semantics<parallel>], iteration_bounds = array<i64: 2>, scalar_prefetch = 0 : i64, scratch_operands = 0 : i64, tpu.core_type = #tpu.core_type<tc>, window_params = [{pipeline_mode = #tpu.pipeline_mode<synchronous>, transform_indices = @transform_0, window_bounds = array<i64: 16, 16>}, {pipeline_mode = #tpu.pipeline_mode<synchronous>, transform_indices = @transform_1, window_bounds = array<i64: 16, 16>}, {pipeline_mode = #tpu.pipeline_mode<synchronous>, transform_indices = @transform_2, window_bounds = array<i64: 16, 16>}, {pipeline_mode = #tpu.pipeline_mode<synchronous>, transform_indices = @transform_3, window_bounds = array<i64: 16, 16>}, {transform_indices = @transform_4, window_bounds = array<i64: 3, 16, 16>}, {transform_indices = @transform_5, window_bounds = array<i64: 3, 16, 16>}, {transform_indices = @transform_6, window_bounds = array<i64: 3, 16, 16>}, {transform_indices = @transform_7, window_bounds = array<i64: 3, 16, 16>}]} {
    %c0 = arith.constant 0 : index
    %c0_0 = arith.constant 0 : index
    %0 = vector.load %arg3[%c0, %c0_0] : memref<16x16xf32, #tpu.memory_space<vmem>>, vector<16x16xf32>
    %c0_1 = arith.constant 0 : index
    %c0_2 = arith.constant 0 : index
    %1 = vector.load %arg4[%c0_1, %c0_2] : memref<16x16xf32, #tpu.memory_space<vmem>>, vector<16x16xf32>
    %c0_3 = arith.constant 0 : index
    %c0_4 = arith.constant 0 : index
    %2 = vector.load %arg1[%c0_3, %c0_4] : memref<16x16xf32, #tpu.memory_space<vmem>>, vector<16x16xf32>
    %c0_5 = arith.constant 0 : index
    %c0_6 = arith.constant 0 : index
    %3 = vector.load %arg2[%c0_5, %c0_6] : memref<16x16xf32, #tpu.memory_space<vmem>>, vector<16x16xf32>
    %c0_7 = arith.constant 0 : index
    %c0_8 = arith.constant 0 : index
    %c0_9 = arith.constant 0 : index
    %4 = vector.load %arg5[%c0_7, %c0_8, %c0_9] : memref<3x16x16xf32, #tpu.memory_space<vmem>>, vector<3x16x16xf32>
    %5 = vector.shape_cast %4 : vector<3x16x16xf32> to vector<48x16xf32>
    %cst = arith.constant dense<0.000000e+00> : vector<48x16xf32>
    %6 = tpu.matmul %5, %0, %cst {dimension_numbers = #tpu.dot_dimension_numbers<[1], [0], [0], [1], [0, 0, 1, 1], [], []>} : vector<48x16xf32>, vector<16x16xf32>, vector<48x16xf32> -> vector<48x16xf32>
    %cst_10 = arith.constant dense<0.000000e+00> : vector<48x16xf32>
    %7 = tpu.matmul %5, %1, %cst_10 {dimension_numbers = #tpu.dot_dimension_numbers<[1], [0], [0], [1], [0, 0, 1, 1], [], []>} : vector<48x16xf32>, vector<16x16xf32>, vector<48x16xf32> -> vector<48x16xf32>
    %8 = vector.shape_cast %6 : vector<48x16xf32> to vector<3x16x16xf32>
    %9 = vector.shape_cast %7 : vector<48x16xf32> to vector<3x16x16xf32>
    %10 = vector.extract_strided_slice %8 {offsets = [0, 0, 0], sizes = [1, 16, 16], strides = [1, 1, 1]} : vector<3x16x16xf32> to vector<1x16x16xf32>
    %11 = vector.shape_cast %10 : vector<1x16x16xf32> to vector<16x16xf32>
    %12 = vector.extract_strided_slice %9 {offsets = [0, 0, 0], sizes = [1, 16, 16], strides = [1, 1, 1]} : vector<3x16x16xf32> to vector<1x16x16xf32>
    %13 = vector.shape_cast %12 : vector<1x16x16xf32> to vector<16x16xf32>
    %cst_11 = arith.constant dense<0.000000e+00> : vector<16x16xf32>
    %14 = tpu.matmul %2, %11, %cst_11 {dimension_numbers = #tpu.dot_dimension_numbers<[1], [0], [0], [1], [0, 0, 1, 1], [], []>} : vector<16x16xf32>, vector<16x16xf32>, vector<16x16xf32> -> vector<16x16xf32>
    %cst_12 = arith.constant dense<0.000000e+00> : vector<16x16xf32>
    %15 = tpu.matmul %3, %13, %cst_12 {dimension_numbers = #tpu.dot_dimension_numbers<[1], [0], [0], [1], [0, 0, 1, 1], [], []>} : vector<16x16xf32>, vector<16x16xf32>, vector<16x16xf32> -> vector<16x16xf32>
    %16 = arith.subf %14, %15 : vector<16x16xf32>
    %cst_13 = arith.constant dense<0.000000e+00> : vector<16x16xf32>
    %17 = tpu.matmul %2, %13, %cst_13 {dimension_numbers = #tpu.dot_dimension_numbers<[1], [0], [0], [1], [0, 0, 1, 1], [], []>} : vector<16x16xf32>, vector<16x16xf32>, vector<16x16xf32> -> vector<16x16xf32>
    %cst_14 = arith.constant dense<0.000000e+00> : vector<16x16xf32>
    %18 = tpu.matmul %3, %11, %cst_14 {dimension_numbers = #tpu.dot_dimension_numbers<[1], [0], [0], [1], [0, 0, 1, 1], [], []>} : vector<16x16xf32>, vector<16x16xf32>, vector<16x16xf32> -> vector<16x16xf32>
    %19 = arith.addf %17, %18 : vector<16x16xf32>
    %c0_15 = arith.constant 0 : index
    %c0_16 = arith.constant 0 : index
    %c0_17 = arith.constant 0 : index
    %20 = vector.load %arg6[%c0_15, %c0_16, %c0_17] : memref<3x16x16xf32, #tpu.memory_space<vmem>>, vector<1x16x16xf32>
    %21 = vector.shape_cast %20 : vector<1x16x16xf32> to vector<16x16xf32>
    %22 = vector.shape_cast %16 : vector<16x16xf32> to vector<1x16x16xf32>
    tpu.vector_store %arg6[%c0_15, %c0_16, %c0_17], %22 {strides = array<i32>} : memref<3x16x16xf32, #tpu.memory_space<vmem>>, vector<1x16x16xf32>,
    %c0_18 = arith.constant 0 : index
    %c0_19 = arith.constant 0 : index
    %c0_20 = arith.constant 0 : index
    %23 = vector.load %arg7[%c0_18, %c0_19, %c0_20] : memref<3x16x16xf32, #tpu.memory_space<vmem>>, vector<1x16x16xf32>
    %24 = vector.shape_cast %23 : vector<1x16x16xf32> to vector<16x16xf32>
    %25 = vector.shape_cast %19 : vector<16x16xf32> to vector<1x16x16xf32>
    tpu.vector_store %arg7[%c0_18, %c0_19, %c0_20], %25 {strides = array<i32>} : memref<3x16x16xf32, #tpu.memory_space<vmem>>, vector<1x16x16xf32>,
    %26 = arith.mulf %16, %16 : vector<16x16xf32>
    %27 = arith.mulf %19, %19 : vector<16x16xf32>
    %28 = arith.addf %26, %27 : vector<16x16xf32>
    %29 = math.sqrt %28 : vector<16x16xf32>
    %c0_21 = arith.constant 0 : index
    %c0_22 = arith.constant 0 : index
    %c0_23 = arith.constant 0 : index
    %30 = vector.load %arg8[%c0_21, %c0_22, %c0_23] : memref<3x16x16xf32, #tpu.memory_space<vmem>>, vector<1x16x16xf32>
    %31 = vector.shape_cast %30 : vector<1x16x16xf32> to vector<16x16xf32>
    %32 = vector.shape_cast %29 : vector<16x16xf32> to vector<1x16x16xf32>
    tpu.vector_store %arg8[%c0_21, %c0_22, %c0_23], %32 {strides = array<i32>} : memref<3x16x16xf32, #tpu.memory_space<vmem>>, vector<1x16x16xf32>,
    %33 = vector.extract_strided_slice %8 {offsets = [1, 0, 0], sizes = [1, 16, 16], strides = [1, 1, 1]} : vector<3x16x16xf32> to vector<1x16x16xf32>
    %34 = vector.shape_cast %33 : vector<1x16x16xf32> to vector<16x16xf32>
    %35 = vector.extract_strided_slice %9 {offsets = [1, 0, 0], sizes = [1, 16, 16], strides = [1, 1, 1]} : vector<3x16x16xf32> to vector<1x16x16xf32>
    %36 = vector.shape_cast %35 : vector<1x16x16xf32> to vector<16x16xf32>
    %cst_24 = arith.constant dense<0.000000e+00> : vector<16x16xf32>
    %37 = tpu.matmul %2, %34, %cst_24 {dimension_numbers = #tpu.dot_dimension_numbers<[1], [0], [0], [1], [0, 0, 1, 1], [], []>} : vector<16x16xf32>, vector<16x16xf32>, vector<16x16xf32> -> vector<16x16xf32>
    %cst_25 = arith.constant dense<0.000000e+00> : vector<16x16xf32>
    %38 = tpu.matmul %3, %36, %cst_25 {dimension_numbers = #tpu.dot_dimension_numbers<[1], [0], [0], [1], [0, 0, 1, 1], [], []>} : vector<16x16xf32>, vector<16x16xf32>, vector<16x16xf32> -> vector<16x16xf32>
    %39 = arith.subf %37, %38 : vector<16x16xf32>
    %cst_26 = arith.constant dense<0.000000e+00> : vector<16x16xf32>
    %40 = tpu.matmul %2, %36, %cst_26 {dimension_numbers = #tpu.dot_dimension_numbers<[1], [0], [0], [1], [0, 0, 1, 1], [], []>} : vector<16x16xf32>, vector<16x16xf32>, vector<16x16xf32> -> vector<16x16xf32>
    %cst_27 = arith.constant dense<0.000000e+00> : vector<16x16xf32>
    %41 = tpu.matmul %3, %34, %cst_27 {dimension_numbers = #tpu.dot_dimension_numbers<[1], [0], [0], [1], [0, 0, 1, 1], [], []>} : vector<16x16xf32>, vector<16x16xf32>, vector<16x16xf32> -> vector<16x16xf32>
    %42 = arith.addf %40, %41 : vector<16x16xf32>
    %c1 = arith.constant 1 : index
    %c0_28 = arith.constant 0 : index
    %c0_29 = arith.constant 0 : index
    %43 = vector.load %arg6[%c1, %c0_28, %c0_29] : memref<3x16x16xf32, #tpu.memory_space<vmem>>, vector<1x16x16xf32>
    %44 = vector.shape_cast %43 : vector<1x16x16xf32> to vector<16x16xf32>
    %45 = vector.shape_cast %39 : vector<16x16xf32> to vector<1x16x16xf32>
    tpu.vector_store %arg6[%c1, %c0_28, %c0_29], %45 {strides = array<i32>} : memref<3x16x16xf32, #tpu.memory_space<vmem>>, vector<1x16x16xf32>,
    %c1_30 = arith.constant 1 : index
    %c0_31 = arith.constant 0 : index
    %c0_32 = arith.constant 0 : index
    %46 = vector.load %arg7[%c1_30, %c0_31, %c0_32] : memref<3x16x16xf32, #tpu.memory_space<vmem>>, vector<1x16x16xf32>
    %47 = vector.shape_cast %46 : vector<1x16x16xf32> to vector<16x16xf32>
    %48 = vector.shape_cast %42 : vector<16x16xf32> to vector<1x16x16xf32>
    tpu.vector_store %arg7[%c1_30, %c0_31, %c0_32], %48 {strides = array<i32>} : memref<3x16x16xf32, #tpu.memory_space<vmem>>, vector<1x16x16xf32>,
    %49 = arith.mulf %39, %39 : vector<16x16xf32>
    %50 = arith.mulf %42, %42 : vector<16x16xf32>
    %51 = arith.addf %49, %50 : vector<16x16xf32>
    %52 = math.sqrt %51 : vector<16x16xf32>
    %c1_33 = arith.constant 1 : index
    %c0_34 = arith.constant 0 : index
    %c0_35 = arith.constant 0 : index
    %53 = vector.load %arg8[%c1_33, %c0_34, %c0_35] : memref<3x16x16xf32, #tpu.memory_space<vmem>>, vector<1x16x16xf32>
    %54 = vector.shape_cast %53 : vector<1x16x16xf32> to vector<16x16xf32>
    %55 = vector.shape_cast %52 : vector<16x16xf32> to vector<1x16x16xf32>
    tpu.vector_store %arg8[%c1_33, %c0_34, %c0_35], %55 {strides = array<i32>} : memref<3x16x16xf32, #tpu.memory_space<vmem>>, vector<1x16x16xf32>,
    %56 = vector.extract_strided_slice %8 {offsets = [2, 0, 0], sizes = [1, 16, 16], strides = [1, 1, 1]} : vector<3x16x16xf32> to vector<1x16x16xf32>
    %57 = vector.shape_cast %56 : vector<1x16x16xf32> to vector<16x16xf32>
    %58 = vector.extract_strided_slice %9 {offsets = [2, 0, 0], sizes = [1, 16, 16], strides = [1, 1, 1]} : vector<3x16x16xf32> to vector<1x16x16xf32>
    %59 = vector.shape_cast %58 : vector<1x16x16xf32> to vector<16x16xf32>
    %cst_36 = arith.constant dense<0.000000e+00> : vector<16x16xf32>
    %60 = tpu.matmul %2, %57, %cst_36 {dimension_numbers = #tpu.dot_dimension_numbers<[1], [0], [0], [1], [0, 0, 1, 1], [], []>} : vector<16x16xf32>, vector<16x16xf32>, vector<16x16xf32> -> vector<16x16xf32>
    %cst_37 = arith.constant dense<0.000000e+00> : vector<16x16xf32>
    %61 = tpu.matmul %3, %59, %cst_37 {dimension_numbers = #tpu.dot_dimension_numbers<[1], [0], [0], [1], [0, 0, 1, 1], [], []>} : vector<16x16xf32>, vector<16x16xf32>, vector<16x16xf32> -> vector<16x16xf32>
    %62 = arith.subf %60, %61 : vector<16x16xf32>
    %cst_38 = arith.constant dense<0.000000e+00> : vector<16x16xf32>
    %63 = tpu.matmul %2, %59, %cst_38 {dimension_numbers = #tpu.dot_dimension_numbers<[1], [0], [0], [1], [0, 0, 1, 1], [], []>} : vector<16x16xf32>, vector<16x16xf32>, vector<16x16xf32> -> vector<16x16xf32>
    %cst_39 = arith.constant dense<0.000000e+00> : vector<16x16xf32>
    %64 = tpu.matmul %3, %57, %cst_39 {dimension_numbers = #tpu.dot_dimension_numbers<[1], [0], [0], [1], [0, 0, 1, 1], [], []>} : vector<16x16xf32>, vector<16x16xf32>, vector<16x16xf32> -> vector<16x16xf32>
    %65 = arith.addf %63, %64 : vector<16x16xf32>
    %c2 = arith.constant 2 : index
    %c0_40 = arith.constant 0 : index
    %c0_41 = arith.constant 0 : index
    %66 = vector.load %arg6[%c2, %c0_40, %c0_41] : memref<3x16x16xf32, #tpu.memory_space<vmem>>, vector<1x16x16xf32>
    %67 = vector.shape_cast %66 : vector<1x16x16xf32> to vector<16x16xf32>
    %68 = vector.shape_cast %62 : vector<16x16xf32> to vector<1x16x16xf32>
    tpu.vector_store %arg6[%c2, %c0_40, %c0_41], %68 {strides = array<i32>} : memref<3x16x16xf32, #tpu.memory_space<vmem>>, vector<1x16x16xf32>,
    %c2_42 = arith.constant 2 : index
    %c0_43 = arith.constant 0 : index
    %c0_44 = arith.constant 0 : index
    %69 = vector.load %arg7[%c2_42, %c0_43, %c0_44] : memref<3x16x16xf32, #tpu.memory_space<vmem>>, vector<1x16x16xf32>
    %70 = vector.shape_cast %69 : vector<1x16x16xf32> to vector<16x16xf32>
    %71 = vector.shape_cast %65 : vector<16x16xf32> to vector<1x16x16xf32>
    tpu.vector_store %arg7[%c2_42, %c0_43, %c0_44], %71 {strides = array<i32>} : memref<3x16x16xf32, #tpu.memory_space<vmem>>, vector<1x16x16xf32>,
    %72 = arith.mulf %62, %62 : vector<16x16xf32>
    %73 = arith.mulf %65, %65 : vector<16x16xf32>
    %74 = arith.addf %72, %73 : vector<16x16xf32>
    %75 = math.sqrt %74 : vector<16x16xf32>
    %c2_45 = arith.constant 2 : index
    %c0_46 = arith.constant 0 : index
    %c0_47 = arith.constant 0 : index
    %76 = vector.load %arg8[%c2_45, %c0_46, %c0_47] : memref<3x16x16xf32, #tpu.memory_space<vmem>>, vector<1x16x16xf32>
    %77 = vector.shape_cast %76 : vector<1x16x16xf32> to vector<16x16xf32>
    %78 = vector.shape_cast %75 : vector<16x16xf32> to vector<1x16x16xf32>
    tpu.vector_store %arg8[%c2_45, %c0_46, %c0_47], %78 {strides = array<i32>} : memref<3x16x16xf32, #tpu.memory_space<vmem>>, vector<1x16x16xf32>,
    return
  }
  func.func @transform_0(%arg0: i32) -> (i32, i32) {
    %c0_i32 = arith.constant 0 : i32
    %c0_i32_0 = arith.constant 0 : i32
    %c0_i32_1 = arith.constant 0 : i32
    return %c0_i32, %c0_i32_0 : i32, i32
  }
  func.func @transform_1(%arg0: i32) -> (i32, i32) {
    %c0_i32 = arith.constant 0 : i32
    %c0_i32_0 = arith.constant 0 : i32
    %c0_i32_1 = arith.constant 0 : i32
    return %c0_i32, %c0_i32_0 : i32, i32
  }
  func.func @transform_2(%arg0: i32) -> (i32, i32) {
    %c0_i32 = arith.constant 0 : i32
    %c0_i32_0 = arith.constant 0 : i32
    %c0_i32_1 = arith.constant 0 : i32
    return %c0_i32, %c0_i32_0 : i32, i32
  }
  func.func @transform_3(%arg0: i32) -> (i32, i32) {
    %c0_i32 = arith.constant 0 : i32
    %c0_i32_0 = arith.constant 0 : i32
    %c0_i32_1 = arith.constant 0 : i32
    return %c0_i32, %c0_i32_0 : i32, i32
  }
  func.func @transform_4(%arg0: i32) -> (i32, i32, i32) {
    %c0_i32 = arith.constant 0 : i32
    %c0_i32_0 = arith.constant 0 : i32
    %c0_i32_1 = arith.constant 0 : i32
    return %arg0, %c0_i32, %c0_i32_0 : i32, i32, i32
  }
  func.func @transform_5(%arg0: i32) -> (i32, i32, i32) {
    %c0_i32 = arith.constant 0 : i32
    %c0_i32_0 = arith.constant 0 : i32
    %c0_i32_1 = arith.constant 0 : i32
    return %arg0, %c0_i32, %c0_i32_0 : i32, i32, i32
  }
  func.func @transform_6(%arg0: i32) -> (i32, i32, i32) {
    %c0_i32 = arith.constant 0 : i32
    %c0_i32_0 = arith.constant 0 : i32
    %c0_i32_1 = arith.constant 0 : i32
    return %arg0, %c0_i32, %c0_i32_0 : i32, i32, i32
  }
  func.func @transform_7(%arg0: i32) -> (i32, i32, i32) {
    %c0_i32 = arith.constant 0 : i32
    %c0_i32_0 = arith.constant 0 : i32
    %c0_i32_1 = arith.constant 0 : i32
    return %arg0, %c0_i32, %c0_i32_0 : i32, i32, i32
  }
}

</mosaic_0001>

<llo_original>
// kernel: tpu_custom_call.1
$region0: #{tpu_custom_call.1}
  #allocation0 [shape = 'u32[]', space=smem, size = 0x4, offset = 0x4, fixed_abs, tag = 'smem constant byte address 0x4 - core index']
  #allocation1 [shape = 'u32[144,128]{1,0:T(1,128)}', space=vmem, size = 0x12000, scoped, tag = 'internal scratch']
  %s0 = inlined_call_operand.hbm [shape: f32[16,16], index: 0, kind: input, shape index: {}]
  %s1 = inlined_call_operand.hbm [shape: f32[16,16], index: 1, kind: input, shape index: {}]
  %s2 = inlined_call_operand.hbm [shape: f32[16,16], index: 2, kind: input, shape index: {}]
  %s3 = inlined_call_operand.hbm [shape: f32[16,16], index: 3, kind: input, shape index: {}]
  %s4 = inlined_call_operand.hbm [shape: f32[6,16,16], index: 4, kind: input, shape index: {}]
  %s5 = inlined_call_operand.hbm [shape: f32[6,16,16], index: 5, kind: output, shape index: {0}]
  %s6 = inlined_call_operand.hbm [shape: f32[6,16,16], index: 6, kind: output, shape index: {1}]
  %s7 = inlined_call_operand.hbm [shape: f32[6,16,16], index: 7, kind: output, shape index: {2}]
  %8 = xla_tuple %s5, %s6, %s7
  %s9 = sld [smem:[#allocation0]]
  $region89: #{tpu_custom_call.1} parent=0
    _
  %s11 = ssub.s32 1, %s9
  %s12 = scalar_select 0, %s11, %s9
  $region1: #{tpu_custom_call.1} parent=0
    #allocation2 [shape = 'u8[8192]{0}', space=vmem, size = 0x2000, scoped, tag = 'input window, operand 0, single buffered']
    #allocation3 [shape = 's32[2]{0}', space=sflag, size = 0x8, scoped, tag = 'scoped memory for tpu_custom_call.1']
    #allocation4 [shape = 's32[2]{0}', space=sflag, size = 0x8, scoped, tag = 'scoped memory for tpu_custom_call.1']
    #allocation5 [shape = 'u8[8192]{0}', space=vmem, size = 0x2000, scoped, tag = 'input window, operand 1, single buffered']
    #allocation6 [shape = 's32[1]{0}', space=sflag, size = 0x4, scoped, tag = 'scoped memory for tpu_custom_call.1']
    #allocation7 [shape = 'u8[8192]{0}', space=vmem, size = 0x2000, scoped, tag = 'input window, operand 2, single buffered']
    #allocation8 [shape = 'u8[8192]{0}', space=vmem, size = 0x2000, scoped, tag = 'input window, operand 3, single buffered']
    #allocation9 [shape = 's32[1]{0}', space=sflag, size = 0x4, scoped, tag = 'scoped memory for tpu_custom_call.1']
    #allocation10 [shape = 'u8[49152]{0}', space=vmem, size = 0xc000, scoped, tag = 'input window, operand 4']
    #allocation11 [shape = 'u8[49152]{0}', space=vmem, size = 0xc000, scoped, tag = 'output window, operand 0']
    #allocation12 [shape = 'u8[49152]{0}', space=vmem, size = 0xc000, scoped, tag = 'output window, operand 1']
    #allocation13 [shape = 's32[2]{0}', space=sflag, size = 0x8, scoped, tag = 'scoped memory for tpu_custom_call.1']
    #allocation14 [shape = 'u8[49152]{0}', space=vmem, size = 0xc000, scoped, tag = 'output window, operand 2']
    %13 = vsyncpa [#allocation3], 0
    %14 = vsyncpa [#allocation6], 0
    %15 = vsyncpa [#allocation9], 0
    %16 = vsyncpa [#allocation4], 0
    %s17 = scalar_lea.sflag [#allocation4], 1
    %18 = vsyncpa %s17, 0
    %19 = vsyncpa [#allocation13], 0
    %s20 = scalar_lea.sflag [#allocation13], 1
    %21 = vsyncpa %s20, 0
    loop: start=0, step=1, limit=4
    $region2: #{tpu_custom_call.1} parent=1 // loop_pre_header
      _
    $region3: #{tpu_custom_call.1} parent=1 // loop_header
      %s23 = sphi 0, %s27
      %p24 = scmp.ge.s32.totalorder %s23, 4
      %s31 = sphi 0, %s31
      %s33 = sphi 0, %s31
      %s34 = sphi 0, %s33
      %s48 = sphi 0, %s34
      %s52 = sphi 0, %s52
      %s54 = sphi 0, %s52
      %s55 = sphi 0, %s54
      %s69 = sphi 0, %s55
      %s73 = sphi 0, %s73
      %s75 = sphi 0, %s73
      %s76 = sphi 0, %s75
      %s90 = sphi 0, %s76
      %s94 = sphi 0, %s94
      %s96 = sphi 0, %s94
      %s97 = sphi 0, %s96
      %s111 = sphi 0, %s97
      %s117 = sphi 0, %s119
      %s120 = sphi 0, %s117
      %s121 = sphi 0, %s120
      %s137 = sphi 0, %s121
      %s143 = sphi 0, %s145
      %s146 = sphi 0, %s143
      %s147 = sphi 0, %s146
      %s163 = sphi 0, %s147
      %s169 = sphi 0, %s171
      %s172 = sphi 0, %s169
      %s173 = sphi 0, %s172
      %s189 = sphi 0, %s173
      %s195 = sphi 0, %s197
      %s198 = sphi 0, %s195
      %s199 = sphi 0, %s198
      %s215 = sphi 0, %s199
    $region4: #{tpu_custom_call.1} parent=1 // loop_header_branch
      %26 = sbr.rel (%p24) target = $region8
    $region5: #{tpu_custom_call.1} parent=1 // loop_body
      %s28 = ssub.s32 %s23, 1
      %s29 = ssub.s32 %s23, 2
      %s30 = sadd.s32 %s23, 1
      %s32 = sadd.s32 %s31, 1
      %p35 = scmp.eq.s32.totalorder %s23, 1
      %p36 = scmp.ne.s32.totalorder %s31, %s33
      %p37 = scmp.eq.s32.totalorder %s23, 0
      %p38 = por %p36, %p37
      %p39 = scmp.ne.s32.totalorder %s31, %s33
      %p40 = scmp.eq.s32.totalorder %s28, 1
      %p41 = por %p39, %p40
      %p42 = scmp.ne.s32.totalorder %s33, %s34
      %p43 = scmp.eq.s32.totalorder %s28, 0
      %p44 = por %p42, %p43
      %p45 = scmp.ne.s32.totalorder %s33, %s34
      %p46 = scmp.eq.s32.totalorder %s29, 1
      %p47 = por %p45, %p46
      %p49 = scmp.ne.s32.totalorder %s34, %s48
      %p50 = scmp.eq.s32.totalorder %s29, 0
      %p51 = por %p49, %p50
      %s53 = sadd.s32 %s52, 1
      %p56 = scmp.eq.s32.totalorder %s23, 1
      %p57 = scmp.ne.s32.totalorder %s52, %s54
      %p58 = scmp.eq.s32.totalorder %s23, 0
      %p59 = por %p57, %p58
      %p60 = scmp.ne.s32.totalorder %s52, %s54
      %p61 = scmp.eq.s32.totalorder %s28, 1
      %p62 = por %p60, %p61
      %p63 = scmp.ne.s32.totalorder %s54, %s55
      %p64 = scmp.eq.s32.totalorder %s28, 0
      %p65 = por %p63, %p64
      %p66 = scmp.ne.s32.totalorder %s54, %s55
      %p67 = scmp.eq.s32.totalorder %s29, 1
      %p68 = por %p66, %p67
      %p70 = scmp.ne.s32.totalorder %s55, %s69
      %p71 = scmp.eq.s32.totalorder %s29, 0
      %p72 = por %p70, %p71
      %s74 = sadd.s32 %s73, 1
      %p77 = scmp.eq.s32.totalorder %s23, 1
      %p78 = scmp.ne.s32.totalorder %s73, %s75
      %p79 = scmp.eq.s32.totalorder %s23, 0
      %p80 = por %p78, %p79
      %p81 = scmp.ne.s32.totalorder %s73, %s75
      %p82 = scmp.eq.s32.totalorder %s28, 1
      %p83 = por %p81, %p82
      %p84 = scmp.ne.s32.totalorder %s75, %s76
      %p85 = scmp.eq.s32.totalorder %s28, 0
      %p86 = por %p84, %p85
      %p87 = scmp.ne.s32.totalorder %s75, %s76
      %p88 = scmp.eq.s32.totalorder %s29, 1
      %p89 = por %p87, %p88
      %p91 = scmp.ne.s32.totalorder %s76, %s90
      %p92 = scmp.eq.s32.totalorder %s29, 0
      %p93 = por %p91, %p92
      %s95 = sadd.s32 %s94, 1
      %p98 = scmp.eq.s32.totalorder %s23, 1
      %p99 = scmp.ne.s32.totalorder %s94, %s96
      %p100 = scmp.eq.s32.totalorder %s23, 0
      %p101 = por %p99, %p100
      %p102 = scmp.ne.s32.totalorder %s94, %s96
      %p103 = scmp.eq.s32.totalorder %s28, 1
      %p104 = por %p102, %p103
      %p105 = scmp.ne.s32.totalorder %s96, %s97
      %p106 = scmp.eq.s32.totalorder %s28, 0
      %p107 = por %p105, %p106
      %p108 = scmp.ne.s32.totalorder %s96, %s97
      %p109 = scmp.eq.s32.totalorder %s29, 1
      %p110 = por %p108, %p109
      %p112 = scmp.ne.s32.totalorder %s97, %s111
      %p113 = scmp.eq.s32.totalorder %s29, 0
      %p114 = por %p112, %p113
      %s115 = ssub.s32 %s23, %s30
      %p116 = scmp.eq.s32.totalorder %s115, 0
      %s118 = sadd.s32 %s117, 1
      %s119 = scalar_select %p116, %s117, %s118
      %p122 = pneg %p116
      %p123 = scmp.eq.s32.totalorder %s23, 1
      %p124 = por %p122, %p123
      %p125 = scmp.ne.s32.totalorder %s117, %s120
      %p126 = scmp.eq.s32.totalorder %s23, 0
      %p127 = por %p125, %p126
      %p128 = scmp.ne.s32.totalorder %s117, %s120
      %p129 = scmp.eq.s32.totalorder %s28, 1
      %p130 = por %p128, %p129
      %p131 = scmp.ne.s32.totalorder %s120, %s121
      %p132 = scmp.eq.s32.totalorder %s28, 0
      %p133 = por %p131, %p132
      %p134 = scmp.ne.s32.totalorder %s120, %s121
      %p135 = scmp.eq.s32.totalorder %s29, 1
      %p136 = por %p134, %p135
      %p138 = scmp.ne.s32.totalorder %s121, %s137
      %p139 = scmp.eq.s32.totalorder %s29, 0
      %p140 = por %p138, %p139
      %s141 = ssub.s32 %s23, %s30
      %p142 = scmp.eq.s32.totalorder %s141, 0
      %s144 = sadd.s32 %s143, 1
      %s145 = scalar_select %p142, %s143, %s144
      %p148 = pneg %p142
      %p149 = scmp.eq.s32.totalorder %s23, 1
      %p150 = por %p148, %p149
      %p151 = scmp.ne.s32.totalorder %s143, %s146
      %p152 = scmp.eq.s32.totalorder %s23, 0
      %p153 = por %p151, %p152
      %p154 = scmp.ne.s32.totalorder %s143, %s146
      %p155 = scmp.eq.s32.totalorder %s28, 1
      %p156 = por %p154, %p155
      %p157 = scmp.ne.s32.totalorder %s146, %s147
      %p158 = scmp.eq.s32.totalorder %s28, 0
      %p159 = por %p157, %p158
      %p160 = scmp.ne.s32.totalorder %s146, %s147
      %p161 = scmp.eq.s32.totalorder %s29, 1
      %p162 = por %p160, %p161
      %p164 = scmp.ne.s32.totalorder %s147, %s163
      %p165 = scmp.eq.s32.totalorder %s29, 0
      %p166 = por %p164, %p165
      %s167 = ssub.s32 %s23, %s30
      %p168 = scmp.eq.s32.totalorder %s167, 0
      %s170 = sadd.s32 %s169, 1
      %s171 = scalar_select %p168, %s169, %s170
      %p174 = pneg %p168
      %p175 = scmp.eq.s32.totalorder %s23, 1
      %p176 = por %p174, %p175
      %p177 = scmp.ne.s32.totalorder %s169, %s172
      %p178 = scmp.eq.s32.totalorder %s23, 0
      %p179 = por %p177, %p178
      %p180 = scmp.ne.s32.totalorder %s169, %s172
      %p181 = scmp.eq.s32.totalorder %s28, 1
      %p182 = por %p180, %p181
      %p183 = scmp.ne.s32.totalorder %s172, %s173
      %p184 = scmp.eq.s32.totalorder %s28, 0
      %p185 = por %p183, %p184
      %p186 = scmp.ne.s32.totalorder %s172, %s173
      %p187 = scmp.eq.s32.totalorder %s29, 1
      %p188 = por %p186, %p187
      %p190 = scmp.ne.s32.totalorder %s173, %s189
      %p191 = scmp.eq.s32.totalorder %s29, 0
      %p192 = por %p190, %p191
      %s193 = ssub.s32 %s23, %s30
      %p194 = scmp.eq.s32.totalorder %s193, 0
      %s196 = sadd.s32 %s195, 1
      %s197 = scalar_select %p194, %s195, %s196
      %p200 = pneg %p194
      %p201 = scmp.eq.s32.totalorder %s23, 1
      %p202 = por %p200, %p201
      %p203 = scmp.ne.s32.totalorder %s195, %s198
      %p204 = scmp.eq.s32.totalorder %s23, 0
      %p205 = por %p203, %p204
      %p206 = scmp.ne.s32.totalorder %s195, %s198
      %p207 = scmp.eq.s32.totalorder %s28, 1
      %p208 = por %p206, %p207
      %p209 = scmp.ne.s32.totalorder %s198, %s199
      %p210 = scmp.eq.s32.totalorder %s28, 0
      %p211 = por %p209, %p210
      %p212 = scmp.ne.s32.totalorder %s198, %s199
      %p213 = scmp.eq.s32.totalorder %s29, 1
      %p214 = por %p212, %p213
      %p216 = scmp.ne.s32.totalorder %s199, %s215
      %p217 = scmp.eq.s32.totalorder %s29, 0
      %p218 = por %p216, %p217
      %p219 = scmp.le.s32.totalorder 1, %s23
      %p220 = scmp.lt.s32.totalorder %s23, 3
      %p221 = pnand %p219, %p220
      %p222 = pneg %p221
      // Predicated region
      $region9: #{tpu_custom_call.1} parent=5 // pred_check
        _
      $region10: #{tpu_custom_call.1} parent=5 // pred_check_branch
        %224 = sbr.rel (%p221) target = $region12
      $region11: #{tpu_custom_call.1} parent=5 // pred_region
        %s225 = ssub.s32 %s23, 1
        // Predicated region
        $region13: #{tpu_custom_call.1} parent=11 // pred_check
          %p226 = pneg %p44
        $region14: #{tpu_custom_call.1} parent=11 // pred_check_branch
          %228 = sbr.rel (%p226) target = $region16
        $region15: #{tpu_custom_call.1} parent=11 // pred_region
          %s230 = ssub.s32 256, 256
          %231 = vsyncadd [#allocation3], %s230
          %s232 = sshll.u32 [#allocation2], 4
          %s233 = int_to_ptr.vmem [resolvable:$true] %s232
          %238 = dma.hbm_to_vmem [thread:$0]  %s0, 256, %s233, [#allocation3], 128, 128, 8
        $region16: #{tpu_custom_call.1} parent=11 // pred_fallthru
          _
        // Predicated region
        $region17: #{tpu_custom_call.1} parent=11 // pred_check
          %p239 = pneg %p65
        $region18: #{tpu_custom_call.1} parent=11 // pred_check_branch
          %241 = sbr.rel (%p239) target = $region20
        $region19: #{tpu_custom_call.1} parent=11 // pred_region
          %s243 = ssub.s32 256, 256
          %244 = vsyncadd [#allocation6], %s243
          %s245 = sshll.u32 [#allocation5], 4
          %s246 = int_to_ptr.vmem [resolvable:$true] %s245
          %251 = dma.hbm_to_vmem [thread:$0]  %s1, 256, %s246, [#allocation6], 128, 128, 8
        $region20: #{tpu_custom_call.1} parent=11 // pred_fallthru
          _
        // Predicated region
        $region21: #{tpu_custom_call.1} parent=11 // pred_check
          %p252 = pneg %p86
        $region22: #{tpu_custom_call.1} parent=11 // pred_check_branch
          %254 = sbr.rel (%p252) target = $region24
        $region23: #{tpu_custom_call.1} parent=11 // pred_region
          %s256 = ssub.s32 256, 256
          %257 = vsyncadd [#allocation6], %s256
          %s258 = sshll.u32 [#allocation7], 4
          %s259 = int_to_ptr.vmem [resolvable:$true] %s258
          %264 = dma.hbm_to_vmem [thread:$0]  %s2, 256, %s259, [#allocation6], 128, 128, 8
        $region24: #{tpu_custom_call.1} parent=11 // pred_fallthru
          _
        // Predicated region
        $region25: #{tpu_custom_call.1} parent=11 // pred_check
          %p265 = pneg %p107
        $region26: #{tpu_custom_call.1} parent=11 // pred_check_branch
          %267 = sbr.rel (%p265) target = $region28
        $region27: #{tpu_custom_call.1} parent=11 // pred_region
          %s269 = ssub.s32 256, 256
          %270 = vsyncadd [#allocation9], %s269
          %s271 = sshll.u32 [#allocation8], 4
          %s272 = int_to_ptr.vmem [resolvable:$true] %s271
          %277 = dma.hbm_to_vmem [thread:$0]  %s3, 256, %s272, [#allocation9], 128, 128, 8
        $region28: #{tpu_custom_call.1} parent=11 // pred_fallthru
          _
      $region12: #{tpu_custom_call.1} parent=5 // pred_fallthru
        _
      %p278 = scmp.lt.s32.totalorder %s23, 2
      // Predicated region
      $region29: #{tpu_custom_call.1} parent=5 // pred_check
        %p279 = pneg %p278
      $region30: #{tpu_custom_call.1} parent=5 // pred_check_branch
        %281 = sbr.rel (%p279) target = $region32
      $region31: #{tpu_custom_call.1} parent=5 // pred_region
        // Predicated region
        $region33: #{tpu_custom_call.1} parent=31 // pred_check
          %p282 = pneg %p127
        $region34: #{tpu_custom_call.1} parent=31 // pred_check_branch
          %284 = sbr.rel (%p282) target = $region36
        $region35: #{tpu_custom_call.1} parent=31 // pred_region
          %s285 = sand.u32 %s23, 1
          %s286 = scalar_lea.sflag [#allocation3], %s285
          %s287 = sand.u32 %s117, 1
          %s288 = smul.addr %s287, 48
          %s289 = scalar_lea.vmem [#allocation10], %s288
          %s290 = smul.u32 3, %s23
          %s292 = ssub.s32 768, 768
          %293 = vsyncadd %s286, %s292
          %s294 = smul.addr %s290, 2
          %s295 = smul.addr %s294, 128
          %s296 = scalar_lea.hbm %s4, %s295
          %s297 = sshll.u32 %s289, 4
          %s298 = int_to_ptr.vmem [resolvable:$true] %s297
          %303 = dma.hbm_to_vmem [thread:$0]  %s296, 768, %s298, %s286, 128, 128, 8
        $region36: #{tpu_custom_call.1} parent=31 // pred_fallthru
          _
      $region32: #{tpu_custom_call.1} parent=5 // pred_fallthru
        _
      %p304 = scmp.le.s32.totalorder 1, %s23
      %p305 = scmp.lt.s32.totalorder %s23, 3
      %p306 = pnand %p304, %p305
      %p307 = pneg %p306
      // Predicated region
      $region37: #{tpu_custom_call.1} parent=5 // pred_check
        _
      $region38: #{tpu_custom_call.1} parent=5 // pred_check_branch
        %309 = sbr.rel (%p306) target = $region40
      $region39: #{tpu_custom_call.1} parent=5 // pred_region
        %s310 = ssub.s32 %s23, 1
        // Predicated region
        $region41: #{tpu_custom_call.1} parent=39 // pred_check
          %p311 = pneg %p44
        $region42: #{tpu_custom_call.1} parent=39 // pred_check_branch
          %313 = sbr.rel (%p311) target = $region44
        $region43: #{tpu_custom_call.1} parent=39 // pred_region
          %314 = dma.done [#allocation3], 256
        $region44: #{tpu_custom_call.1} parent=39 // pred_fallthru
          _
        // Predicated region
        $region45: #{tpu_custom_call.1} parent=39 // pred_check
          %p315 = pneg %p65
        $region46: #{tpu_custom_call.1} parent=39 // pred_check_branch
          %317 = sbr.rel (%p315) target = $region48
        $region47: #{tpu_custom_call.1} parent=39 // pred_region
          %318 = dma.done [#allocation6], 256
        $region48: #{tpu_custom_call.1} parent=39 // pred_fallthru
          _
        // Predicated region
        $region49: #{tpu_custom_call.1} parent=39 // pred_check
          %p319 = pneg %p86
        $region50: #{tpu_custom_call.1} parent=39 // pred_check_branch
          %321 = sbr.rel (%p319) target = $region52
        $region51: #{tpu_custom_call.1} parent=39 // pred_region
          %322 = dma.done [#allocation6], 256
        $region52: #{tpu_custom_call.1} parent=39 // pred_fallthru
          _
        // Predicated region
        $region53: #{tpu_custom_call.1} parent=39 // pred_check
          %p323 = pneg %p107
        $region54: #{tpu_custom_call.1} parent=39 // pred_check_branch
          %325 = sbr.rel (%p323) target = $region56
        $region55: #{tpu_custom_call.1} parent=39 // pred_region
          %326 = dma.done [#allocation9], 256
        $region56: #{tpu_custom_call.1} parent=39 // pred_fallthru
          _
        %s327 = sand.u32 %s28, 1
        %s328 = scalar_lea.sflag [#allocation3], %s327
        %s329 = sand.u32 %s120, 1
        %s330 = smul.addr %s329, 48
        %s331 = scalar_lea.vmem [#allocation10], %s330
        // Predicated region
        $region57: #{tpu_custom_call.1} parent=39 // pred_check
          %p332 = pneg %p133
        $region58: #{tpu_custom_call.1} parent=39 // pred_check_branch
          %334 = sbr.rel (%p332) target = $region60
        $region59: #{tpu_custom_call.1} parent=39 // pred_region
          %335 = dma.done %s328, 768
        $region60: #{tpu_custom_call.1} parent=39 // pred_fallthru
          _
        %p336 = pneg %p44
        %p337 = pneg %p41
        %p338 = pneg %p65
        %p339 = pneg %p62
        %p340 = pneg %p86
        %p341 = pneg %p83
        %p342 = pneg %p107
        %p343 = pneg %p104
        %s344 = sand.u32 %s28, 1
        %s345 = scalar_lea.sflag [#allocation3], %s344
        %s346 = sand.u32 %s120, 1
        %s347 = smul.addr %s346, 48
        %s348 = scalar_lea.vmem [#allocation10], %s347
        %p349 = pneg %p133
        %p350 = pneg %p130
        %p351 = pneg %p159
        %p352 = pneg %p156
        %s353 = sand.u32 %s146, 1
        %s354 = scalar_lea.sflag [#allocation4], %s353
        %s355 = sand.u32 %s146, 1
        %s356 = smul.addr %s355, 48
        %s357 = scalar_lea.vmem [#allocation11], %s356
        %p358 = pneg %p185
        %p359 = pneg %p182
        %s360 = sand.u32 %s28, 1
        %s361 = scalar_lea.sflag [#allocation13], %s360
        %s362 = sand.u32 %s172, 1
        %s363 = smul.addr %s362, 48
        %s364 = scalar_lea.vmem [#allocation12], %s363
        %p365 = pneg %p211
        %p366 = pneg %p208
        %s367 = sand.u32 %s28, 1
        %s368 = scalar_lea.sflag [#allocation13], %s367
        %s369 = sand.u32 %s198, 1
        %s370 = smul.addr %s369, 48
        %s371 = scalar_lea.vmem [#allocation14], %s370
        %s372 = smul.u32 3, %s28
        %s373 = smul.u32 3, %s28
        %s374 = smul.u32 3, %s28
        %s375 = smul.u32 3, %s28
        %v376 = vld [vmem:[#allocation7] sm:$0xff]
        %v377 = vld [vmem:[#allocation7 + $0x8] sm:$0xff]
        %v378 = vld [vmem:[#allocation8] sm:$0xff]
        %v379 = vld [vmem:[#allocation8 + $0x8] sm:$0xff]
        %v380 = vld [vmem:[#allocation2] sm:$0xff]
        %v381 = vld [vmem:[#allocation2 + $0x8] sm:$0xff]
        %v382 = vld [vmem:[#allocation5] sm:$0xff]
        %v383 = vld [vmem:[#allocation5 + $0x8] sm:$0xff]
        %v384 = vld [vmem:[%s331] sm:$0xff]
        %v385 = vld [vmem:[%s331 + $0x8] sm:$0xff]
        %v386 = vld [vmem:[%s331 + $0x10] sm:$0xff]
        %v387 = vld [vmem:[%s331 + $0x18] sm:$0xff]
        %v388 = vld [vmem:[%s331 + $0x20] sm:$0xff]
        %v389 = vld [vmem:[%s331 + $0x28] sm:$0xff]
        %vm390 = vcmask 130048
        %v392 = vsel %vm390, %v384, 0
        %v395 = vsel %vm390, %v385, 0
        %v398 = vsel %vm390, %v386, 0
        %v401 = vsel %vm390, %v387, 0
        %v404 = vsel %vm390, %v388, 0
        %v407 = vsel %vm390, %v389, 0
        %409 = vmatprep.subr.mxu0 0.0
        %410 = vmatpush1.msra.mxu0 %v376
        %411 = vmatprep.subr.mxu0 0.0
        %412 = vmatpush1.msra.mxu0 %v377
        %413 = vmatprep.subr.mxu0 0.0
        %414 = vmatpush1.msra.mxu0 0.0
        %415 = vmatprep.subr.mxu0 0.0
        %416 = vmatpush1.msra.mxu0 0.0
        %417 = vmatprep.subr.mxu0 0.0
        %418 = vmatpush1.msra.mxu0 0.0
        %419 = vmatprep.subr.mxu0 0.0
        %420 = vmatpush1.msra.mxu0 0.0
        %421 = vmatprep.subr.mxu0 0.0
        %422 = vmatpush1.msra.mxu0 0.0
        %423 = vmatprep.subr.mxu0 0.0
        %424 = vmatpush1.msra.mxu0 0.0
        %425 = vmatprep.subr.mxu0 0.0
        %426 = vmatpush1.msra.mxu0 0.0
        %427 = vmatprep.subr.mxu0 0.0
        %428 = vmatpush1.msra.mxu0 0.0
        %429 = vmatprep.subr.mxu0 0.0
        %430 = vmatpush1.msra.mxu0 0.0
        %431 = vmatprep.subr.mxu0 0.0
        %432 = vmatpush1.msra.mxu0 0.0
        %433 = vmatprep.subr.mxu0 0.0
        %434 = vmatpush1.msra.mxu0 0.0
        %435 = vmatprep.subr.mxu0 0.0
        %436 = vmatpush1.msra.mxu0 0.0
        %437 = vmatprep.subr.mxu0 0.0
        %438 = vmatpush1.msra.mxu0 0.0
        %439 = vmatprep.subr.mxu0 0.0
        %440 = vmatpush1.msra.mxu0 0.0
        %441 = vmatprep.subr.mxu0 0.0
        %442 = vmatpush1.msra.mxu0 0.0
        %443 = vmatprep.subr.mxu0 0.0
        %444 = vmatpush1.msra.mxu0 0.0
        %445 = vmatprep.subr.mxu0 0.0
        %446 = vmatpush1.msra.mxu0 0.0
        %447 = vmatprep.subr.mxu0 0.0
        %448 = vmatpush1.msra.mxu0 0.0
        %449 = vmatprep.subr.mxu0 0.0
        %450 = vmatpush1.msra.mxu0 0.0
        %451 = vmatprep.subr.mxu0 0.0
        %452 = vmatpush1.msra.mxu0 0.0
        %453 = vmatprep.subr.mxu0 0.0
        %454 = vmatpush1.msra.mxu0 0.0
        %455 = vmatprep.subr.mxu0 0.0
        %456 = vmatpush1.msra.mxu0 0.0
        %457 = vmatprep.subr.mxu0 0.0
        %458 = vmatpush1.msra.mxu0 0.0
        %459 = vmatprep.subr.mxu0 0.0
        %460 = vmatpush1.msra.mxu0 0.0
        %461 = vmatprep.subr.mxu0 0.0
        %462 = vmatpush1.msra.mxu0 0.0
        %463 = vmatprep.subr.mxu0 0.0
        %464 = vmatpush1.msra.mxu0 0.0
        %465 = vmatprep.subr.mxu0 0.0
        %466 = vmatpush1.msra.mxu0 0.0
        %467 = vmatprep.subr.mxu0 0.0
        %468 = vmatpush1.msra.mxu0 0.0
        %469 = vmatprep.subr.mxu0 0.0
        %470 = vmatpush1.msra.mxu0 0.0
        %471 = vmatprep.subr.mxu0 0.0
        %472 = vmatpush1.msra.mxu0 0.0
        %473 = vmatprep.mubr.f32.mxu0 0.0
        %474 = vmatmul.mubr.f32.gmra.mrb[0].mxu0 %v392
        %v475 = vpop.f32.mrb[0].mxu0
        %v476 = vadd.f32 0.0, %v475
        %v477 = vpop.f32.mrb[0].mxu0
        %478 = vmatprep.mubr.f32.mxu0 0.0
        %479 = vmatmul.mubr.f32.gmra.mrb[0].mxu0 %v395
        %v480 = vpop.f32.mrb[0].mxu0
        %v481 = vadd.f32 0.0, %v480
        %v482 = vpop.f32.mrb[0].mxu0
        %483 = vmatprep.mubr.f32.mxu0 0.0
        %484 = vmatmul.mubr.f32.gmra.mrb[0].mxu0 %v398
        %v485 = vpop.f32.mrb[0].mxu0
        %v486 = vadd.f32 0.0, %v485
        %v487 = vpop.f32.mrb[0].mxu0
        %488 = vmatprep.mubr.f32.mxu0 0.0
        %489 = vmatmul.mubr.f32.gmra.mrb[0].mxu0 %v401
        %v490 = vpop.f32.mrb[0].mxu0
        %v491 = vadd.f32 0.0, %v490
        %v492 = vpop.f32.mrb[0].mxu0
        %493 = vmatprep.mubr.f32.mxu0 0.0
        %494 = vmatmul.mubr.f32.gmra.mrb[0].mxu0 %v404
        %v495 = vpop.f32.mrb[0].mxu0
        %v496 = vadd.f32 0.0, %v495
        %v497 = vpop.f32.mrb[0].mxu0
        %498 = vmatprep.mubr.f32.mxu0 0.0
        %499 = vmatmul.mubr.f32.gmra.mrb[0].mxu0 %v407
        %v500 = vpop.f32.mrb[0].mxu0
        %v501 = vadd.f32 0.0, %v500
        %v502 = vpop.f32.mrb[0].mxu0
        %503 = vdwg.mxu0
        %504 = vmatprep.subr.mxu0 0.0
        %505 = vmatpush1.msra.mxu0 %v378
        %506 = vmatprep.subr.mxu0 0.0
        %507 = vmatpush1.msra.mxu0 %v379
        %508 = vmatprep.subr.mxu0 0.0
        %509 = vmatpush1.msra.mxu0 0.0
        %510 = vmatprep.subr.mxu0 0.0
        %511 = vmatpush1.msra.mxu0 0.0
        %512 = vmatprep.subr.mxu0 0.0
        %513 = vmatpush1.msra.mxu0 0.0
        %514 = vmatprep.subr.mxu0 0.0
        %515 = vmatpush1.msra.mxu0 0.0
        %516 = vmatprep.subr.mxu0 0.0
        %517 = vmatpush1.msra.mxu0 0.0
        %518 = vmatprep.subr.mxu0 0.0
        %519 = vmatpush1.msra.mxu0 0.0
        %520 = vmatprep.subr.mxu0 0.0
        %521 = vmatpush1.msra.mxu0 0.0
        %522 = vmatprep.subr.mxu0 0.0
        %523 = vmatpush1.msra.mxu0 0.0
        %524 = vmatprep.subr.mxu0 0.0
        %525 = vmatpush1.msra.mxu0 0.0
        %526 = vmatprep.subr.mxu0 0.0
        %527 = vmatpush1.msra.mxu0 0.0
        %528 = vmatprep.subr.mxu0 0.0
        %529 = vmatpush1.msra.mxu0 0.0
        %530 = vmatprep.subr.mxu0 0.0
        %531 = vmatpush1.msra.mxu0 0.0
        %532 = vmatprep.subr.mxu0 0.0
        %533 = vmatpush1.msra.mxu0 0.0
        %534 = vmatprep.subr.mxu0 0.0
        %535 = vmatpush1.msra.mxu0 0.0
        %536 = vmatprep.subr.mxu0 0.0
        %537 = vmatpush1.msra.mxu0 0.0
        %538 = vmatprep.subr.mxu0 0.0
        %539 = vmatpush1.msra.mxu0 0.0
        %540 = vmatprep.subr.mxu0 0.0
        %541 = vmatpush1.msra.mxu0 0.0
        %542 = vmatprep.subr.mxu0 0.0
        %543 = vmatpush1.msra.mxu0 0.0
        %544 = vmatprep.subr.mxu0 0.0
        %545 = vmatpush1.msra.mxu0 0.0
        %546 = vmatprep.subr.mxu0 0.0
        %547 = vmatpush1.msra.mxu0 0.0
        %548 = vmatprep.subr.mxu0 0.0
        %549 = vmatpush1.msra.mxu0 0.0
        %550 = vmatprep.subr.mxu0 0.0
        %551 = vmatpush1.msra.mxu0 0.0
        %552 = vmatprep.subr.mxu0 0.0
        %553 = vmatpush1.msra.mxu0 0.0
        %554 = vmatprep.subr.mxu0 0.0
        %555 = vmatpush1.msra.mxu0 0.0
        %556 = vmatprep.subr.mxu0 0.0
        %557 = vmatpush1.msra.mxu0 0.0
        %558 = vmatprep.subr.mxu0 0.0
        %559 = vmatpush1.msra.mxu0 0.0
        %560 = vmatprep.subr.mxu0 0.0
        %561 = vmatpush1.msra.mxu0 0.0
        %562 = vmatprep.subr.mxu0 0.0
        %563 = vmatpush1.msra.mxu0 0.0
        %564 = vmatprep.subr.mxu0 0.0
        %565 = vmatpush1.msra.mxu0 0.0
        %566 = vmatprep.subr.mxu0 0.0
        %567 = vmatpush1.msra.mxu0 0.0
        %568 = vmatprep.mubr.f32.mxu0 0.0
        %569 = vmatmul.mubr.f32.gmra.mrb[0].mxu0 %v392
        %v570 = vpop.f32.mrb[0].mxu0
        %v571 = vadd.f32 0.0, %v570
        %v572 = vpop.f32.mrb[0].mxu0
        %573 = vmatprep.mubr.f32.mxu0 0.0
        %574 = vmatmul.mubr.f32.gmra.mrb[0].mxu0 %v395
        %v575 = vpop.f32.mrb[0].mxu0
        %v576 = vadd.f32 0.0, %v575
        %v577 = vpop.f32.mrb[0].mxu0
        %578 = vmatprep.mubr.f32.mxu0 0.0
        %579 = vmatmul.mubr.f32.gmra.mrb[0].mxu0 %v398
        %v580 = vpop.f32.mrb[0].mxu0
        %v581 = vadd.f32 0.0, %v580
        %v582 = vpop.f32.mrb[0].mxu0
        %583 = vmatprep.mubr.f32.mxu0 0.0
        %584 = vmatmul.mubr.f32.gmra.mrb[0].mxu0 %v401
        %v585 = vpop.f32.mrb[0].mxu0
        %v586 = vadd.f32 0.0, %v585
        %v587 = vpop.f32.mrb[0].mxu0
        %588 = vmatprep.mubr.f32.mxu0 0.0
        %589 = vmatmul.mubr.f32.gmra.mrb[0].mxu0 %v404
        %v590 = vpop.f32.mrb[0].mxu0
        %v591 = vadd.f32 0.0, %v590
        %v592 = vpop.f32.mrb[0].mxu0
        %593 = vmatprep.mubr.f32.mxu0 0.0
        %594 = vmatmul.mubr.f32.gmra.mrb[0].mxu0 %v407
        %v595 = vpop.f32.mrb[0].mxu0
        %v596 = vadd.f32 0.0, %v595
        %v597 = vpop.f32.mrb[0].mxu0
        %598 = vdwg.mxu0
        %v600 = vsel %vm390, %v380, 0
        %v603 = vsel %vm390, %v381, 0
        %605 = vmatprep.subr.mxu0 0.0
        %606 = vmatpush1.msra.mxu0 %v476
        %607 = vmatprep.subr.mxu0 0.0
        %608 = vmatpush1.msra.mxu0 %v481
        %609 = vmatprep.subr.mxu0 0.0
        %610 = vmatpush1.msra.mxu0 0.0
        %611 = vmatprep.subr.mxu0 0.0
        %612 = vmatpush1.msra.mxu0 0.0
        %613 = vmatprep.subr.mxu0 0.0
        %614 = vmatpush1.msra.mxu0 0.0
        %615 = vmatprep.subr.mxu0 0.0
        %616 = vmatpush1.msra.mxu0 0.0
        %617 = vmatprep.subr.mxu0 0.0
        %618 = vmatpush1.msra.mxu0 0.0
        %619 = vmatprep.subr.mxu0 0.0
        %620 = vmatpush1.msra.mxu0 0.0
        %621 = vmatprep.subr.mxu0 0.0
        %622 = vmatpush1.msra.mxu0 0.0
        %623 = vmatprep.subr.mxu0 0.0
        %624 = vmatpush1.msra.mxu0 0.0
        %625 = vmatprep.subr.mxu0 0.0
        %626 = vmatpush1.msra.mxu0 0.0
        %627 = vmatprep.subr.mxu0 0.0
        %628 = vmatpush1.msra.mxu0 0.0
        %629 = vmatprep.subr.mxu0 0.0
        %630 = vmatpush1.msra.mxu0 0.0
        %631 = vmatprep.subr.mxu0 0.0
        %632 = vmatpush1.msra.mxu0 0.0
        %633 = vmatprep.subr.mxu0 0.0
        %634 = vmatpush1.msra.mxu0 0.0
        %635 = vmatprep.subr.mxu0 0.0
        %636 = vmatpush1.msra.mxu0 0.0
        %637 = vmatprep.subr.mxu0 0.0
        %638 = vmatpush1.msra.mxu0 0.0
        %639 = vmatprep.subr.mxu0 0.0
        %640 = vmatpush1.msra.mxu0 0.0
        %641 = vmatprep.subr.mxu0 0.0
        %642 = vmatpush1.msra.mxu0 0.0
        %643 = vmatprep.subr.mxu0 0.0
        %644 = vmatpush1.msra.mxu0 0.0
        %645 = vmatprep.subr.mxu0 0.0
        %646 = vmatpush1.msra.mxu0 0.0
        %647 = vmatprep.subr.mxu0 0.0
        %648 = vmatpush1.msra.mxu0 0.0
        %649 = vmatprep.subr.mxu0 0.0
        %650 = vmatpush1.msra.mxu0 0.0
        %651 = vmatprep.subr.mxu0 0.0
        %652 = vmatpush1.msra.mxu0 0.0
        %653 = vmatprep.subr.mxu0 0.0
        %654 = vmatpush1.msra.mxu0 0.0
        %655 = vmatprep.subr.mxu0 0.0
        %656 = vmatpush1.msra.mxu0 0.0
        %657 = vmatprep.subr.mxu0 0.0
        %658 = vmatpush1.msra.mxu0 0.0
        %659 = vmatprep.subr.mxu0 0.0
        %660 = vmatpush1.msra.mxu0 0.0
        %661 = vmatprep.subr.mxu0 0.0
        %662 = vmatpush1.msra.mxu0 0.0
        %663 = vmatprep.subr.mxu0 0.0
        %664 = vmatpush1.msra.mxu0 0.0
        %665 = vmatprep.subr.mxu0 0.0
        %666 = vmatpush1.msra.mxu0 0.0
        %667 = vmatprep.subr.mxu0 0.0
        %668 = vmatpush1.msra.mxu0 0.0
        %669 = vmatprep.mubr.f32.mxu0 0.0
        %670 = vmatmul.mubr.f32.gmra.mrb[0].mxu0 %v600
        %v671 = vpop.f32.mrb[0].mxu0
        %v672 = vadd.f32 0.0, %v671
        %v673 = vpop.f32.mrb[0].mxu0
        %674 = vmatprep.mubr.f32.mxu0 0.0
        %675 = vmatmul.mubr.f32.gmra.mrb[0].mxu0 %v603
        %v676 = vpop.f32.mrb[0].mxu0
        %v677 = vadd.f32 0.0, %v676
        %v678 = vpop.f32.mrb[0].mxu0
        %679 = vdwg.mxu0
        %v681 = vsel %vm390, %v382, 0
        %v684 = vsel %vm390, %v383, 0
        %686 = vmatprep.subr.mxu0 0.0
        %687 = vmatpush1.msra.mxu0 %v571
        %688 = vmatprep.subr.mxu0 0.0
        %689 = vmatpush1.msra.mxu0 %v576
        %690 = vmatprep.subr.mxu0 0.0
        %691 = vmatpush1.msra.mxu0 0.0
        %692 = vmatprep.subr.mxu0 0.0
        %693 = vmatpush1.msra.mxu0 0.0
        %694 = vmatprep.subr.mxu0 0.0
        %695 = vmatpush1.msra.mxu0 0.0
        %696 = vmatprep.subr.mxu0 0.0
        %697 = vmatpush1.msra.mxu0 0.0
        %698 = vmatprep.subr.mxu0 0.0
        %699 = vmatpush1.msra.mxu0 0.0
        %700 = vmatprep.subr.mxu0 0.0
        %701 = vmatpush1.msra.mxu0 0.0
        %702 = vmatprep.subr.mxu0 0.0
        %703 = vmatpush1.msra.mxu0 0.0
        %704 = vmatprep.subr.mxu0 0.0
        %705 = vmatpush1.msra.mxu0 0.0
        %706 = vmatprep.subr.mxu0 0.0
        %707 = vmatpush1.msra.mxu0 0.0
        %708 = vmatprep.subr.mxu0 0.0
        %709 = vmatpush1.msra.mxu0 0.0
        %710 = vmatprep.subr.mxu0 0.0
        %711 = vmatpush1.msra.mxu0 0.0
        %712 = vmatprep.subr.mxu0 0.0
        %713 = vmatpush1.msra.mxu0 0.0
        %714 = vmatprep.subr.mxu0 0.0
        %715 = vmatpush1.msra.mxu0 0.0
        %716 = vmatprep.subr.mxu0 0.0
        %717 = vmatpush1.msra.mxu0 0.0
        %718 = vmatprep.subr.mxu0 0.0
        %719 = vmatpush1.msra.mxu0 0.0
        %720 = vmatprep.subr.mxu0 0.0
        %721 = vmatpush1.msra.mxu0 0.0
        %722 = vmatprep.subr.mxu0 0.0
        %723 = vmatpush1.msra.mxu0 0.0
        %724 = vmatprep.subr.mxu0 0.0
        %725 = vmatpush1.msra.mxu0 0.0
        %726 = vmatprep.subr.mxu0 0.0
        %727 = vmatpush1.msra.mxu0 0.0
        %728 = vmatprep.subr.mxu0 0.0
        %729 = vmatpush1.msra.mxu0 0.0
        %730 = vmatprep.subr.mxu0 0.0
        %731 = vmatpush1.msra.mxu0 0.0
        %732 = vmatprep.subr.mxu0 0.0
        %733 = vmatpush1.msra.mxu0 0.0
        %734 = vmatprep.subr.mxu0 0.0
        %735 = vmatpush1.msra.mxu0 0.0
        %736 = vmatprep.subr.mxu0 0.0
        %737 = vmatpush1.msra.mxu0 0.0
        %738 = vmatprep.subr.mxu0 0.0
        %739 = vmatpush1.msra.mxu0 0.0
        %740 = vmatprep.subr.mxu0 0.0
        %741 = vmatpush1.msra.mxu0 0.0
        %742 = vmatprep.subr.mxu0 0.0
        %743 = vmatpush1.msra.mxu0 0.0
        %744 = vmatprep.subr.mxu0 0.0
        %745 = vmatpush1.msra.mxu0 0.0
        %746 = vmatprep.subr.mxu0 0.0
        %747 = vmatpush1.msra.mxu0 0.0
        %748 = vmatprep.subr.mxu0 0.0
        %749 = vmatpush1.msra.mxu0 0.0
        %750 = vmatprep.mubr.f32.mxu0 0.0
        %751 = vmatmul.mubr.f32.gmra.mrb[0].mxu0 %v681
        %v752 = vpop.f32.mrb[0].mxu0
        %v753 = vadd.f32 0.0, %v752
        %v754 = vpop.f32.mrb[0].mxu0
        %755 = vmatprep.mubr.f32.mxu0 0.0
        %756 = vmatmul.mubr.f32.gmra.mrb[0].mxu0 %v684
        %v757 = vpop.f32.mrb[0].mxu0
        %v758 = vadd.f32 0.0, %v757
        %v759 = vpop.f32.mrb[0].mxu0
        %760 = vdwg.mxu0
        %v761 = vsub.f32 %v672, %v753
        %v762 = vsub.f32 %v677, %v758
        %763 = vmatprep.subr.mxu0 0.0
        %764 = vmatpush1.msra.mxu0 %v476
        %765 = vmatprep.subr.mxu0 0.0
        %766 = vmatpush1.msra.mxu0 %v481
        %767 = vmatprep.subr.mxu0 0.0
        %768 = vmatpush1.msra.mxu0 0.0
        %769 = vmatprep.subr.mxu0 0.0
        %770 = vmatpush1.msra.mxu0 0.0
        %771 = vmatprep.subr.mxu0 0.0
        %772 = vmatpush1.msra.mxu0 0.0
        %773 = vmatprep.subr.mxu0 0.0
        %774 = vmatpush1.msra.mxu0 0.0
        %775 = vmatprep.subr.mxu0 0.0
        %776 = vmatpush1.msra.mxu0 0.0
        %777 = vmatprep.subr.mxu0 0.0
        %778 = vmatpush1.msra.mxu0 0.0
        %779 = vmatprep.subr.mxu0 0.0
        %780 = vmatpush1.msra.mxu0 0.0
        %781 = vmatprep.subr.mxu0 0.0
        %782 = vmatpush1.msra.mxu0 0.0
        %783 = vmatprep.subr.mxu0 0.0
        %784 = vmatpush1.msra.mxu0 0.0
        %785 = vmatprep.subr.mxu0 0.0
        %786 = vmatpush1.msra.mxu0 0.0
        %787 = vmatprep.subr.mxu0 0.0
        %788 = vmatpush1.msra.mxu0 0.0
        %789 = vmatprep.subr.mxu0 0.0
        %790 = vmatpush1.msra.mxu0 0.0
        %791 = vmatprep.subr.mxu0 0.0
        %792 = vmatpush1.msra.mxu0 0.0
        %793 = vmatprep.subr.mxu0 0.0
        %794 = vmatpush1.msra.mxu0 0.0
        %795 = vmatprep.subr.mxu0 0.0
        %796 = vmatpush1.msra.mxu0 0.0
        %797 = vmatprep.subr.mxu0 0.0
        %798 = vmatpush1.msra.mxu0 0.0
        %799 = vmatprep.subr.mxu0 0.0
        %800 = vmatpush1.msra.mxu0 0.0
        %801 = vmatprep.subr.mxu0 0.0
        %802 = vmatpush1.msra.mxu0 0.0
        %803 = vmatprep.subr.mxu0 0.0
        %804 = vmatpush1.msra.mxu0 0.0
        %805 = vmatprep.subr.mxu0 0.0
        %806 = vmatpush1.msra.mxu0 0.0
        %807 = vmatprep.subr.mxu0 0.0
        %808 = vmatpush1.msra.mxu0 0.0
        %809 = vmatprep.subr.mxu0 0.0
        %810 = vmatpush1.msra.mxu0 0.0
        %811 = vmatprep.subr.mxu0 0.0
        %812 = vmatpush1.msra.mxu0 0.0
        %813 = vmatprep.subr.mxu0 0.0
        %814 = vmatpush1.msra.mxu0 0.0
        %815 = vmatprep.subr.mxu0 0.0
        %816 = vmatpush1.msra.mxu0 0.0
        %817 = vmatprep.subr.mxu0 0.0
        %818 = vmatpush1.msra.mxu0 0.0
        %819 = vmatprep.subr.mxu0 0.0
        %820 = vmatpush1.msra.mxu0 0.0
        %821 = vmatprep.subr.mxu0 0.0
        %822 = vmatpush1.msra.mxu0 0.0
        %823 = vmatprep.subr.mxu0 0.0
        %824 = vmatpush1.msra.mxu0 0.0
        %825 = vmatprep.subr.mxu0 0.0
        %826 = vmatpush1.msra.mxu0 0.0
        %827 = vmatprep.mubr.f32.mxu0 0.0
        %828 = vmatmul.mubr.f32.gmra.mrb[0].mxu0 %v681
        %v829 = vpop.f32.mrb[0].mxu0
        %v830 = vadd.f32 0.0, %v829
        %v831 = vpop.f32.mrb[0].mxu0
        %832 = vmatprep.mubr.f32.mxu0 0.0
        %833 = vmatmul.mubr.f32.gmra.mrb[0].mxu0 %v684
        %v834 = vpop.f32.mrb[0].mxu0
        %v835 = vadd.f32 0.0, %v834
        %v836 = vpop.f32.mrb[0].mxu0
        %837 = vdwg.mxu0
        %838 = vmatprep.subr.mxu0 0.0
        %839 = vmatpush1.msra.mxu0 %v571
        %840 = vmatprep.subr.mxu0 0.0
        %841 = vmatpush1.msra.mxu0 %v576
        %842 = vmatprep.subr.mxu0 0.0
        %843 = vmatpush1.msra.mxu0 0.0
        %844 = vmatprep.subr.mxu0 0.0
        %845 = vmatpush1.msra.mxu0 0.0
        %846 = vmatprep.subr.mxu0 0.0
        %847 = vmatpush1.msra.mxu0 0.0
        %848 = vmatprep.subr.mxu0 0.0
        %849 = vmatpush1.msra.mxu0 0.0
        %850 = vmatprep.subr.mxu0 0.0
        %851 = vmatpush1.msra.mxu0 0.0
        %852 = vmatprep.subr.mxu0 0.0
        %853 = vmatpush1.msra.mxu0 0.0
        %854 = vmatprep.subr.mxu0 0.0
        %855 = vmatpush1.msra.mxu0 0.0
        %856 = vmatprep.subr.mxu0 0.0
        %857 = vmatpush1.msra.mxu0 0.0
        %858 = vmatprep.subr.mxu0 0.0
        %859 = vmatpush1.msra.mxu0 0.0
        %860 = vmatprep.subr.mxu0 0.0
        %861 = vmatpush1.msra.mxu0 0.0
        %862 = vmatprep.subr.mxu0 0.0
        %863 = vmatpush1.msra.mxu0 0.0
        %864 = vmatprep.subr.mxu0 0.0
        %865 = vmatpush1.msra.mxu0 0.0
        %866 = vmatprep.subr.mxu0 0.0
        %867 = vmatpush1.msra.mxu0 0.0
        %868 = vmatprep.subr.mxu0 0.0
        %869 = vmatpush1.msra.mxu0 0.0
        %870 = vmatprep.subr.mxu0 0.0
        %871 = vmatpush1.msra.mxu0 0.0
        %872 = vmatprep.subr.mxu0 0.0
        %873 = vmatpush1.msra.mxu0 0.0
        %874 = vmatprep.subr.mxu0 0.0
        %875 = vmatpush1.msra.mxu0 0.0
        %876 = vmatprep.subr.mxu0 0.0
        %877 = vmatpush1.msra.mxu0 0.0
        %878 = vmatprep.subr.mxu0 0.0
        %879 = vmatpush1.msra.mxu0 0.0
        %880 = vmatprep.subr.mxu0 0.0
        %881 = vmatpush1.msra.mxu0 0.0
        %882 = vmatprep.subr.mxu0 0.0
        %883 = vmatpush1.msra.mxu0 0.0
        %884 = vmatprep.subr.mxu0 0.0
        %885 = vmatpush1.msra.mxu0 0.0
        %886 = vmatprep.subr.mxu0 0.0
        %887 = vmatpush1.msra.mxu0 0.0
        %888 = vmatprep.subr.mxu0 0.0
        %889 = vmatpush1.msra.mxu0 0.0
        %890 = vmatprep.subr.mxu0 0.0
        %891 = vmatpush1.msra.mxu0 0.0
        %892 = vmatprep.subr.mxu0 0.0
        %893 = vmatpush1.msra.mxu0 0.0
        %894 = vmatprep.subr.mxu0 0.0
        %895 = vmatpush1.msra.mxu0 0.0
        %896 = vmatprep.subr.mxu0 0.0
        %897 = vmatpush1.msra.mxu0 0.0
        %898 = vmatprep.subr.mxu0 0.0
        %899 = vmatpush1.msra.mxu0 0.0
        %900 = vmatprep.subr.mxu0 0.0
        %901 = vmatpush1.msra.mxu0 0.0
        %902 = vmatprep.mubr.f32.mxu0 0.0
        %903 = vmatmul.mubr.f32.gmra.mrb[0].mxu0 %v600
        %v904 = vpop.f32.mrb[0].mxu0
        %v905 = vadd.f32 %v830, %v904
        %v906 = vpop.f32.mrb[0].mxu0
        %907 = vmatprep.mubr.f32.mxu0 0.0
        %908 = vmatmul.mubr.f32.gmra.mrb[0].mxu0 %v603
        %v909 = vpop.f32.mrb[0].mxu0
        %v910 = vadd.f32 %v835, %v909
        %v911 = vpop.f32.mrb[0].mxu0
        %912 = vdwg.mxu0
        %913 = vst.msk [vmem:[%s357] sm:$0xff] %vm390, %v761
        %914 = vst.msk [vmem:[%s357 + $0x8] sm:$0xff] %vm390, %v762
        %915 = vst.msk [vmem:[%s364] sm:$0xff] %vm390, %v905
        %916 = vst.msk [vmem:[%s364 + $0x8] sm:$0xff] %vm390, %v910
        %v917 = vmul.f32 %v761, %v761
        %v918 = vmul.f32 %v762, %v762
        %v919 = vmul.f32 %v905, %v905
        %v920 = vmul.f32 %v910, %v910
        %v921 = vadd.f32 %v917, %v919
        %v922 = vadd.f32 %v918, %v920
        %v923 = vrsqrt.pop %v921
        %v924 = vmul.f32 %v921, %v923
        %vm925 = vcmp.eq.f32.partialorder %v921, inf
        %v926 = vsel %vm925, %v921, %v924
        %vm927 = vcmp.eq.f32.partialorder %v921, 0.0
        %v928 = vand.u32 %v921, 2147483648
        %v929 = vsel %vm927, %v928, %v926
        %v930 = vrsqrt.pop %v922
        %v931 = vmul.f32 %v922, %v930
        %vm932 = vcmp.eq.f32.partialorder %v922, inf
        %v933 = vsel %vm932, %v922, %v931
        %vm934 = vcmp.eq.f32.partialorder %v922, 0.0
        %v935 = vand.u32 %v922, 2147483648
        %v936 = vsel %vm934, %v935, %v933
        %937 = vst.msk [vmem:[%s371] sm:$0xff] %vm390, %v929
        %938 = vst.msk [vmem:[%s371 + $0x8] sm:$0xff] %vm390, %v936
        %939 = vmatprep.subr.mxu0 0.0
        %940 = vmatpush1.msra.mxu0 %v486
        %941 = vmatprep.subr.mxu0 0.0
        %942 = vmatpush1.msra.mxu0 %v491
        %943 = vmatprep.subr.mxu0 0.0
        %944 = vmatpush1.msra.mxu0 0.0
        %945 = vmatprep.subr.mxu0 0.0
        %946 = vmatpush1.msra.mxu0 0.0
        %947 = vmatprep.subr.mxu0 0.0
        %948 = vmatpush1.msra.mxu0 0.0
        %949 = vmatprep.subr.mxu0 0.0
        %950 = vmatpush1.msra.mxu0 0.0
        %951 = vmatprep.subr.mxu0 0.0
        %952 = vmatpush1.msra.mxu0 0.0
        %953 = vmatprep.subr.mxu0 0.0
        %954 = vmatpush1.msra.mxu0 0.0
        %955 = vmatprep.subr.mxu0 0.0
        %956 = vmatpush1.msra.mxu0 0.0
        %957 = vmatprep.subr.mxu0 0.0
        %958 = vmatpush1.msra.mxu0 0.0
        %959 = vmatprep.subr.mxu0 0.0
        %960 = vmatpush1.msra.mxu0 0.0
        %961 = vmatprep.subr.mxu0 0.0
        %962 = vmatpush1.msra.mxu0 0.0
        %963 = vmatprep.subr.mxu0 0.0
        %964 = vmatpush1.msra.mxu0 0.0
        %965 = vmatprep.subr.mxu0 0.0
        %966 = vmatpush1.msra.mxu0 0.0
        %967 = vmatprep.subr.mxu0 0.0
        %968 = vmatpush1.msra.mxu0 0.0
        %969 = vmatprep.subr.mxu0 0.0
        %970 = vmatpush1.msra.mxu0 0.0
        %971 = vmatprep.subr.mxu0 0.0
        %972 = vmatpush1.msra.mxu0 0.0
        %973 = vmatprep.subr.mxu0 0.0
        %974 = vmatpush1.msra.mxu0 0.0
        %975 = vmatprep.subr.mxu0 0.0
        %976 = vmatpush1.msra.mxu0 0.0
        %977 = vmatprep.subr.mxu0 0.0
        %978 = vmatpush1.msra.mxu0 0.0
        %979 = vmatprep.subr.mxu0 0.0
        %980 = vmatpush1.msra.mxu0 0.0
        %981 = vmatprep.subr.mxu0 0.0
        %982 = vmatpush1.msra.mxu0 0.0
        %983 = vmatprep.subr.mxu0 0.0
        %984 = vmatpush1.msra.mxu0 0.0
        %985 = vmatprep.subr.mxu0 0.0
        %986 = vmatpush1.msra.mxu0 0.0
        %987 = vmatprep.subr.mxu0 0.0
        %988 = vmatpush1.msra.mxu0 0.0
        %989 = vmatprep.subr.mxu0 0.0
        %990 = vmatpush1.msra.mxu0 0.0
        %991 = vmatprep.subr.mxu0 0.0
        %992 = vmatpush1.msra.mxu0 0.0
        %993 = vmatprep.subr.mxu0 0.0
        %994 = vmatpush1.msra.mxu0 0.0
        %995 = vmatprep.subr.mxu0 0.0
        %996 = vmatpush1.msra.mxu0 0.0
        %997 = vmatprep.subr.mxu0 0.0
        %998 = vmatpush1.msra.mxu0 0.0
        %999 = vmatprep.subr.mxu0 0.0
        %1000 = vmatpush1.msra.mxu0 0.0
        %1001 = vmatprep.subr.mxu0 0.0
        %1002 = vmatpush1.msra.mxu0 0.0
        %1003 = vmatprep.mubr.f32.mxu0 0.0
        %1004 = vmatmul.mubr.f32.gmra.mrb[0].mxu0 %v600
        %v1005 = vpop.f32.mrb[0].mxu0
        %v1006 = vadd.f32 0.0, %v1005
        %v1007 = vpop.f32.mrb[0].mxu0
        %1008 = vmatprep.mubr.f32.mxu0 0.0
        %1009 = vmatmul.mubr.f32.gmra.mrb[0].mxu0 %v603
        %v1010 = vpop.f32.mrb[0].mxu0
        %v1011 = vadd.f32 0.0, %v1010
        %v1012 = vpop.f32.mrb[0].mxu0
        %1013 = vdwg.mxu0
        %1014 = vmatprep.subr.mxu0 0.0
        %1015 = vmatpush1.msra.mxu0 %v581
        %1016 = vmatprep.subr.mxu0 0.0
        %1017 = vmatpush1.msra.mxu0 %v586
        %1018 = vmatprep.subr.mxu0 0.0
        %1019 = vmatpush1.msra.mxu0 0.0
        %1020 = vmatprep.subr.mxu0 0.0
        %1021 = vmatpush1.msra.mxu0 0.0
        %1022 = vmatprep.subr.mxu0 0.0
        %1023 = vmatpush1.msra.mxu0 0.0
        %1024 = vmatprep.subr.mxu0 0.0
        %1025 = vmatpush1.msra.mxu0 0.0
        %1026 = vmatprep.subr.mxu0 0.0
        %1027 = vmatpush1.msra.mxu0 0.0
        %1028 = vmatprep.subr.mxu0 0.0
        %1029 = vmatpush1.msra.mxu0 0.0
        %1030 = vmatprep.subr.mxu0 0.0
        %1031 = vmatpush1.msra.mxu0 0.0
        %1032 = vmatprep.subr.mxu0 0.0
        %1033 = vmatpush1.msra.mxu0 0.0
        %1034 = vmatprep.subr.mxu0 0.0
        %1035 = vmatpush1.msra.mxu0 0.0
        %1036 = vmatprep.subr.mxu0 0.0
        %1037 = vmatpush1.msra.mxu0 0.0
        %1038 = vmatprep.subr.mxu0 0.0
        %1039 = vmatpush1.msra.mxu0 0.0
        %1040 = vmatprep.subr.mxu0 0.0
        %1041 = vmatpush1.msra.mxu0 0.0
        %1042 = vmatprep.subr.mxu0 0.0
        %1043 = vmatpush1.msra.mxu0 0.0
        %1044 = vmatprep.subr.mxu0 0.0
        %1045 = vmatpush1.msra.mxu0 0.0
        %1046 = vmatprep.subr.mxu0 0.0
        %1047 = vmatpush1.msra.mxu0 0.0
        %1048 = vmatprep.subr.mxu0 0.0
        %1049 = vmatpush1.msra.mxu0 0.0
        %1050 = vmatprep.subr.mxu0 0.0
        %1051 = vmatpush1.msra.mxu0 0.0
        %1052 = vmatprep.subr.mxu0 0.0
        %1053 = vmatpush1.msra.mxu0 0.0
        %1054 = vmatprep.subr.mxu0 0.0
        %1055 = vmatpush1.msra.mxu0 0.0
        %1056 = vmatprep.subr.mxu0 0.0
        %1057 = vmatpush1.msra.mxu0 0.0
        %1058 = vmatprep.subr.mxu0 0.0
        %1059 = vmatpush1.msra.mxu0 0.0
        %1060 = vmatprep.subr.mxu0 0.0
        %1061 = vmatpush1.msra.mxu0 0.0
        %1062 = vmatprep.subr.mxu0 0.0
        %1063 = vmatpush1.msra.mxu0 0.0
        %1064 = vmatprep.subr.mxu0 0.0
        %1065 = vmatpush1.msra.mxu0 0.0
        %1066 = vmatprep.subr.mxu0 0.0
        %1067 = vmatpush1.msra.mxu0 0.0
        %1068 = vmatprep.subr.mxu0 0.0
        %1069 = vmatpush1.msra.mxu0 0.0
        %1070 = vmatprep.subr.mxu0 0.0
        %1071 = vmatpush1.msra.mxu0 0.0
        %1072 = vmatprep.subr.mxu0 0.0
        %1073 = vmatpush1.msra.mxu0 0.0
        %1074 = vmatprep.subr.mxu0 0.0
        %1075 = vmatpush1.msra.mxu0 0.0
        %1076 = vmatprep.subr.mxu0 0.0
        %1077 = vmatpush1.msra.mxu0 0.0
        %1078 = vmatprep.mubr.f32.mxu0 0.0
        %1079 = vmatmul.mubr.f32.gmra.mrb[0].mxu0 %v681
        %v1080 = vpop.f32.mrb[0].mxu0
        %v1081 = vadd.f32 0.0, %v1080
        %v1082 = vpop.f32.mrb[0].mxu0
        %1083 = vmatprep.mubr.f32.mxu0 0.0
        %1084 = vmatmul.mubr.f32.gmra.mrb[0].mxu0 %v684
        %v1085 = vpop.f32.mrb[0].mxu0
        %v1086 = vadd.f32 0.0, %v1085
        %v1087 = vpop.f32.mrb[0].mxu0
        %1088 = vdwg.mxu0
        %v1089 = vsub.f32 %v1006, %v1081
        %v1090 = vsub.f32 %v1011, %v1086
        %1091 = vmatprep.subr.mxu0 0.0
        %1092 = vmatpush1.msra.mxu0 %v486
        %1093 = vmatprep.subr.mxu0 0.0
        %1094 = vmatpush1.msra.mxu0 %v491
        %1095 = vmatprep.subr.mxu0 0.0
        %1096 = vmatpush1.msra.mxu0 0.0
        %1097 = vmatprep.subr.mxu0 0.0
        %1098 = vmatpush1.msra.mxu0 0.0
        %1099 = vmatprep.subr.mxu0 0.0
        %1100 = vmatpush1.msra.mxu0 0.0
        %1101 = vmatprep.subr.mxu0 0.0
        %1102 = vmatpush1.msra.mxu0 0.0
        %1103 = vmatprep.subr.mxu0 0.0
        %1104 = vmatpush1.msra.mxu0 0.0
        %1105 = vmatprep.subr.mxu0 0.0
        %1106 = vmatpush1.msra.mxu0 0.0
        %1107 = vmatprep.subr.mxu0 0.0
        %1108 = vmatpush1.msra.mxu0 0.0
        %1109 = vmatprep.subr.mxu0 0.0
        %1110 = vmatpush1.msra.mxu0 0.0
        %1111 = vmatprep.subr.mxu0 0.0
        %1112 = vmatpush1.msra.mxu0 0.0
        %1113 = vmatprep.subr.mxu0 0.0
        %1114 = vmatpush1.msra.mxu0 0.0
        %1115 = vmatprep.subr.mxu0 0.0
        %1116 = vmatpush1.msra.mxu0 0.0
        %1117 = vmatprep.subr.mxu0 0.0
        %1118 = vmatpush1.msra.mxu0 0.0
        %1119 = vmatprep.subr.mxu0 0.0
        %1120 = vmatpush1.msra.mxu0 0.0
        %1121 = vmatprep.subr.mxu0 0.0
        %1122 = vmatpush1.msra.mxu0 0.0
        %1123 = vmatprep.subr.mxu0 0.0
        %1124 = vmatpush1.msra.mxu0 0.0
        %1125 = vmatprep.subr.mxu0 0.0
        %1126 = vmatpush1.msra.mxu0 0.0
        %1127 = vmatprep.subr.mxu0 0.0
        %1128 = vmatpush1.msra.mxu0 0.0
        %1129 = vmatprep.subr.mxu0 0.0
        %1130 = vmatpush1.msra.mxu0 0.0
        %1131 = vmatprep.subr.mxu0 0.0
        %1132 = vmatpush1.msra.mxu0 0.0
        %1133 = vmatprep.subr.mxu0 0.0
        %1134 = vmatpush1.msra.mxu0 0.0
        %1135 = vmatprep.subr.mxu0 0.0
        %1136 = vmatpush1.msra.mxu0 0.0
        %1137 = vmatprep.subr.mxu0 0.0
        %1138 = vmatpush1.msra.mxu0 0.0
        %1139 = vmatprep.subr.mxu0 0.0
        %1140 = vmatpush1.msra.mxu0 0.0
        %1141 = vmatprep.subr.mxu0 0.0
        %1142 = vmatpush1.msra.mxu0 0.0
        %1143 = vmatprep.subr.mxu0 0.0
        %1144 = vmatpush1.msra.mxu0 0.0
        %1145 = vmatprep.subr.mxu0 0.0
        %1146 = vmatpush1.msra.mxu0 0.0
        %1147 = vmatprep.subr.mxu0 0.0
        %1148 = vmatpush1.msra.mxu0 0.0
        %1149 = vmatprep.subr.mxu0 0.0
        %1150 = vmatpush1.msra.mxu0 0.0
        %1151 = vmatprep.subr.mxu0 0.0
        %1152 = vmatpush1.msra.mxu0 0.0
        %1153 = vmatprep.subr.mxu0 0.0
        %1154 = vmatpush1.msra.mxu0 0.0
        %1155 = vmatprep.mubr.f32.mxu0 0.0
        %1156 = vmatmul.mubr.f32.gmra.mrb[0].mxu0 %v681
        %v1157 = vpop.f32.mrb[0].mxu0
        %v1158 = vadd.f32 0.0, %v1157
        %v1159 = vpop.f32.mrb[0].mxu0
        %1160 = vmatprep.mubr.f32.mxu0 0.0
        %1161 = vmatmul.mubr.f32.gmra.mrb[0].mxu0 %v684
        %v1162 = vpop.f32.mrb[0].mxu0
        %v1163 = vadd.f32 0.0, %v1162
        %v1164 = vpop.f32.mrb[0].mxu0
        %1165 = vdwg.mxu0
        %1166 = vmatprep.subr.mxu0 0.0
        %1167 = vmatpush1.msra.mxu0 %v581
        %1168 = vmatprep.subr.mxu0 0.0
        %1169 = vmatpush1.msra.mxu0 %v586
        %1170 = vmatprep.subr.mxu0 0.0
        %1171 = vmatpush1.msra.mxu0 0.0
        %1172 = vmatprep.subr.mxu0 0.0
        %1173 = vmatpush1.msra.mxu0 0.0
        %1174 = vmatprep.subr.mxu0 0.0
        %1175 = vmatpush1.msra.mxu0 0.0
        %1176 = vmatprep.subr.mxu0 0.0
        %1177 = vmatpush1.msra.mxu0 0.0
        %1178 = vmatprep.subr.mxu0 0.0
        %1179 = vmatpush1.msra.mxu0 0.0
        %1180 = vmatprep.subr.mxu0 0.0
        %1181 = vmatpush1.msra.mxu0 0.0
        %1182 = vmatprep.subr.mxu0 0.0
        %1183 = vmatpush1.msra.mxu0 0.0
        %1184 = vmatprep.subr.mxu0 0.0
        %1185 = vmatpush1.msra.mxu0 0.0
        %1186 = vmatprep.subr.mxu0 0.0
        %1187 = vmatpush1.msra.mxu0 0.0
        %1188 = vmatprep.subr.mxu0 0.0
        %1189 = vmatpush1.msra.mxu0 0.0
        %1190 = vmatprep.subr.mxu0 0.0
        %1191 = vmatpush1.msra.mxu0 0.0
        %1192 = vmatprep.subr.mxu0 0.0
        %1193 = vmatpush1.msra.mxu0 0.0
        %1194 = vmatprep.subr.mxu0 0.0
        %1195 = vmatpush1.msra.mxu0 0.0
        %1196 = vmatprep.subr.mxu0 0.0
        %1197 = vmatpush1.msra.mxu0 0.0
        %1198 = vmatprep.subr.mxu0 0.0
        %1199 = vmatpush1.msra.mxu0 0.0
        %1200 = vmatprep.subr.mxu0 0.0
        %1201 = vmatpush1.msra.mxu0 0.0
        %1202 = vmatprep.subr.mxu0 0.0
        %1203 = vmatpush1.msra.mxu0 0.0
        %1204 = vmatprep.subr.mxu0 0.0
        %1205 = vmatpush1.msra.mxu0 0.0
        %1206 = vmatprep.subr.mxu0 0.0
        %1207 = vmatpush1.msra.mxu0 0.0
        %1208 = vmatprep.subr.mxu0 0.0
        %1209 = vmatpush1.msra.mxu0 0.0
        %1210 = vmatprep.subr.mxu0 0.0
        %1211 = vmatpush1.msra.mxu0 0.0
        %1212 = vmatprep.subr.mxu0 0.0
        %1213 = vmatpush1.msra.mxu0 0.0
        %1214 = vmatprep.subr.mxu0 0.0
        %1215 = vmatpush1.msra.mxu0 0.0
        %1216 = vmatprep.subr.mxu0 0.0
        %1217 = vmatpush1.msra.mxu0 0.0
        %1218 = vmatprep.subr.mxu0 0.0
        %1219 = vmatpush1.msra.mxu0 0.0
        %1220 = vmatprep.subr.mxu0 0.0
        %1221 = vmatpush1.msra.mxu0 0.0
        %1222 = vmatprep.subr.mxu0 0.0
        %1223 = vmatpush1.msra.mxu0 0.0
        %1224 = vmatprep.subr.mxu0 0.0
        %1225 = vmatpush1.msra.mxu0 0.0
        %1226 = vmatprep.subr.mxu0 0.0
        %1227 = vmatpush1.msra.mxu0 0.0
        %1228 = vmatprep.subr.mxu0 0.0
        %1229 = vmatpush1.msra.mxu0 0.0
        %1230 = vmatprep.mubr.f32.mxu0 0.0
        %1231 = vmatmul.mubr.f32.gmra.mrb[0].mxu0 %v600
        %v1232 = vpop.f32.mrb[0].mxu0
        %v1233 = vadd.f32 %v1158, %v1232
        %v1234 = vpop.f32.mrb[0].mxu0
        %1235 = vmatprep.mubr.f32.mxu0 0.0
        %1236 = vmatmul.mubr.f32.gmra.mrb[0].mxu0 %v603
        %v1237 = vpop.f32.mrb[0].mxu0
        %v1238 = vadd.f32 %v1163, %v1237
        %v1239 = vpop.f32.mrb[0].mxu0
        %1240 = vdwg.mxu0
        %s1241 = scalar_lea.vmem %s357, 16 [#allocation11]
        %1242 = vst.msk [vmem:[%s1241] sm:$0xff] %vm390, %v1089
        %1243 = vst.msk [vmem:[%s1241 + $0x8] sm:$0xff] %vm390, %v1090
        %s1244 = scalar_lea.vmem %s364, 16 [#allocation12]
        %1245 = vst.msk [vmem:[%s1244] sm:$0xff] %vm390, %v1233
        %1246 = vst.msk [vmem:[%s1244 + $0x8] sm:$0xff] %vm390, %v1238
        %v1247 = vmul.f32 %v1089, %v1089
        %v1248 = vmul.f32 %v1090, %v1090
        %v1249 = vmul.f32 %v1233, %v1233
        %v1250 = vmul.f32 %v1238, %v1238
        %v1251 = vadd.f32 %v1247, %v1249
        %v1252 = vadd.f32 %v1248, %v1250
        %v1253 = vrsqrt.pop %v1251
        %v1254 = vmul.f32 %v1251, %v1253
        %vm1255 = vcmp.eq.f32.partialorder %v1251, inf
        %v1256 = vsel %vm1255, %v1251, %v1254
        %vm1257 = vcmp.eq.f32.partialorder %v1251, 0.0
        %v1258 = vand.u32 %v1251, 2147483648
        %v1259 = vsel %vm1257, %v1258, %v1256
        %v1260 = vrsqrt.pop %v1252
        %v1261 = vmul.f32 %v1252, %v1260
        %vm1262 = vcmp.eq.f32.partialorder %v1252, inf
        %v1263 = vsel %vm1262, %v1252, %v1261
        %vm1264 = vcmp.eq.f32.partialorder %v1252, 0.0
        %v1265 = vand.u32 %v1252, 2147483648
        %v1266 = vsel %vm1264, %v1265, %v1263
        %s1267 = scalar_lea.vmem %s371, 16 [#allocation14]
        %1268 = vst.msk [vmem:[%s1267] sm:$0xff] %vm390, %v1259
        %1269 = vst.msk [vmem:[%s1267 + $0x8] sm:$0xff] %vm390, %v1266
        %1270 = vmatprep.subr.mxu0 0.0
        %1271 = vmatpush1.msra.mxu0 %v496
        %1272 = vmatprep.subr.mxu0 0.0
        %1273 = vmatpush1.msra.mxu0 %v501
        %1274 = vmatprep.subr.mxu0 0.0
        %1275 = vmatpush1.msra.mxu0 0.0
        %1276 = vmatprep.subr.mxu0 0.0
        %1277 = vmatpush1.msra.mxu0 0.0
        %1278 = vmatprep.subr.mxu0 0.0
        %1279 = vmatpush1.msra.mxu0 0.0
        %1280 = vmatprep.subr.mxu0 0.0
        %1281 = vmatpush1.msra.mxu0 0.0
        %1282 = vmatprep.subr.mxu0 0.0
        %1283 = vmatpush1.msra.mxu0 0.0
        %1284 = vmatprep.subr.mxu0 0.0
        %1285 = vmatpush1.msra.mxu0 0.0
        %1286 = vmatprep.subr.mxu0 0.0
        %1287 = vmatpush1.msra.mxu0 0.0
        %1288 = vmatprep.subr.mxu0 0.0
        %1289 = vmatpush1.msra.mxu0 0.0
        %1290 = vmatprep.subr.mxu0 0.0
        %1291 = vmatpush1.msra.mxu0 0.0
        %1292 = vmatprep.subr.mxu0 0.0
        %1293 = vmatpush1.msra.mxu0 0.0
        %1294 = vmatprep.subr.mxu0 0.0
        %1295 = vmatpush1.msra.mxu0 0.0
        %1296 = vmatprep.subr.mxu0 0.0
        %1297 = vmatpush1.msra.mxu0 0.0
        %1298 = vmatprep.subr.mxu0 0.0
        %1299 = vmatpush1.msra.mxu0 0.0
        %1300 = vmatprep.subr.mxu0 0.0
        %1301 = vmatpush1.msra.mxu0 0.0
        %1302 = vmatprep.subr.mxu0 0.0
        %1303 = vmatpush1.msra.mxu0 0.0
        %1304 = vmatprep.subr.mxu0 0.0
        %1305 = vmatpush1.msra.mxu0 0.0
        %1306 = vmatprep.subr.mxu0 0.0
        %1307 = vmatpush1.msra.mxu0 0.0
        %1308 = vmatprep.subr.mxu0 0.0
        %1309 = vmatpush1.msra.mxu0 0.0
        %1310 = vmatprep.subr.mxu0 0.0
        %1311 = vmatpush1.msra.mxu0 0.0
        %1312 = vmatprep.subr.mxu0 0.0
        %1313 = vmatpush1.msra.mxu0 0.0
        %1314 = vmatprep.subr.mxu0 0.0
        %1315 = vmatpush1.msra.mxu0 0.0
        %1316 = vmatprep.subr.mxu0 0.0
        %1317 = vmatpush1.msra.mxu0 0.0
        %1318 = vmatprep.subr.mxu0 0.0
        %1319 = vmatpush1.msra.mxu0 0.0
        %1320 = vmatprep.subr.mxu0 0.0
        %1321 = vmatpush1.msra.mxu0 0.0
        %1322 = vmatprep.subr.mxu0 0.0
        %1323 = vmatpush1.msra.mxu0 0.0
        %1324 = vmatprep.subr.mxu0 0.0
        %1325 = vmatpush1.msra.mxu0 0.0
        %1326 = vmatprep.subr.mxu0 0.0
        %1327 = vmatpush1.msra.mxu0 0.0
        %1328 = vmatprep.subr.mxu0 0.0
        %1329 = vmatpush1.msra.mxu0 0.0
        %1330 = vmatprep.subr.mxu0 0.0
        %1331 = vmatpush1.msra.mxu0 0.0
        %1332 = vmatprep.subr.mxu0 0.0
        %1333 = vmatpush1.msra.mxu0 0.0
        %1334 = vmatprep.mubr.f32.mxu0 0.0
        %1335 = vmatmul.mubr.f32.gmra.mrb[0].mxu0 %v600
        %v1336 = vpop.f32.mrb[0].mxu0
        %v1337 = vadd.f32 0.0, %v1336
        %v1338 = vpop.f32.mrb[0].mxu0
        %1339 = vmatprep.mubr.f32.mxu0 0.0
        %1340 = vmatmul.mubr.f32.gmra.mrb[0].mxu0 %v603
        %v1341 = vpop.f32.mrb[0].mxu0
        %v1342 = vadd.f32 0.0, %v1341
        %v1343 = vpop.f32.mrb[0].mxu0
        %1344 = vdwg.mxu0
        %1345 = vmatprep.subr.mxu0 0.0
        %1346 = vmatpush1.msra.mxu0 %v591
        %1347 = vmatprep.subr.mxu0 0.0
        %1348 = vmatpush1.msra.mxu0 %v596
        %1349 = vmatprep.subr.mxu0 0.0
        %1350 = vmatpush1.msra.mxu0 0.0
        %1351 = vmatprep.subr.mxu0 0.0
        %1352 = vmatpush1.msra.mxu0 0.0
        %1353 = vmatprep.subr.mxu0 0.0
        %1354 = vmatpush1.msra.mxu0 0.0
        %1355 = vmatprep.subr.mxu0 0.0
        %1356 = vmatpush1.msra.mxu0 0.0
        %1357 = vmatprep.subr.mxu0 0.0
        %1358 = vmatpush1.msra.mxu0 0.0
        %1359 = vmatprep.subr.mxu0 0.0
        %1360 = vmatpush1.msra.mxu0 0.0
        %1361 = vmatprep.subr.mxu0 0.0
        %1362 = vmatpush1.msra.mxu0 0.0
        %1363 = vmatprep.subr.mxu0 0.0
        %1364 = vmatpush1.msra.mxu0 0.0
        %1365 = vmatprep.subr.mxu0 0.0
        %1366 = vmatpush1.msra.mxu0 0.0
        %1367 = vmatprep.subr.mxu0 0.0
        %1368 = vmatpush1.msra.mxu0 0.0
        %1369 = vmatprep.subr.mxu0 0.0
        %1370 = vmatpush1.msra.mxu0 0.0
        %1371 = vmatprep.subr.mxu0 0.0
        %1372 = vmatpush1.msra.mxu0 0.0
        %1373 = vmatprep.subr.mxu0 0.0
        %1374 = vmatpush1.msra.mxu0 0.0
        %1375 = vmatprep.subr.mxu0 0.0
        %1376 = vmatpush1.msra.mxu0 0.0
        %1377 = vmatprep.subr.mxu0 0.0
        %1378 = vmatpush1.msra.mxu0 0.0
        %1379 = vmatprep.subr.mxu0 0.0
        %1380 = vmatpush1.msra.mxu0 0.0
        %1381 = vmatprep.subr.mxu0 0.0
        %1382 = vmatpush1.msra.mxu0 0.0
        %1383 = vmatprep.subr.mxu0 0.0
        %1384 = vmatpush1.msra.mxu0 0.0
        %1385 = vmatprep.subr.mxu0 0.0
        %1386 = vmatpush1.msra.mxu0 0.0
        %1387 = vmatprep.subr.mxu0 0.0
        %1388 = vmatpush1.msra.mxu0 0.0
        %1389 = vmatprep.subr.mxu0 0.0
        %1390 = vmatpush1.msra.mxu0 0.0
        %1391 = vmatprep.subr.mxu0 0.0
        %1392 = vmatpush1.msra.mxu0 0.0
        %1393 = vmatprep.subr.mxu0 0.0
        %1394 = vmatpush1.msra.mxu0 0.0
        %1395 = vmatprep.subr.mxu0 0.0
        %1396 = vmatpush1.msra.mxu0 0.0
        %1397 = vmatprep.subr.mxu0 0.0
        %1398 = vmatpush1.msra.mxu0 0.0
        %1399 = vmatprep.subr.mxu0 0.0
        %1400 = vmatpush1.msra.mxu0 0.0
        %1401 = vmatprep.subr.mxu0 0.0
        %1402 = vmatpush1.msra.mxu0 0.0
        %1403 = vmatprep.subr.mxu0 0.0
        %1404 = vmatpush1.msra.mxu0 0.0
        %1405 = vmatprep.subr.mxu0 0.0
        %1406 = vmatpush1.msra.mxu0 0.0
        %1407 = vmatprep.subr.mxu0 0.0
        %1408 = vmatpush1.msra.mxu0 0.0
        %1409 = vmatprep.mubr.f32.mxu0 0.0
        %1410 = vmatmul.mubr.f32.gmra.mrb[0].mxu0 %v681
        %v1411 = vpop.f32.mrb[0].mxu0
        %v1412 = vadd.f32 0.0, %v1411
        %v1413 = vpop.f32.mrb[0].mxu0
        %1414 = vmatprep.mubr.f32.mxu0 0.0
        %1415 = vmatmul.mubr.f32.gmra.mrb[0].mxu0 %v684
        %v1416 = vpop.f32.mrb[0].mxu0
        %v1417 = vadd.f32 0.0, %v1416
        %v1418 = vpop.f32.mrb[0].mxu0
        %1419 = vdwg.mxu0
        %v1420 = vsub.f32 %v1337, %v1412
        %v1421 = vsub.f32 %v1342, %v1417
        %1422 = vmatprep.subr.mxu0 0.0
        %1423 = vmatpush1.msra.mxu0 %v496
        %1424 = vmatprep.subr.mxu0 0.0
        %1425 = vmatpush1.msra.mxu0 %v501
        %1426 = vmatprep.subr.mxu0 0.0
        %1427 = vmatpush1.msra.mxu0 0.0
        %1428 = vmatprep.subr.mxu0 0.0
        %1429 = vmatpush1.msra.mxu0 0.0
        %1430 = vmatprep.subr.mxu0 0.0
        %1431 = vmatpush1.msra.mxu0 0.0
        %1432 = vmatprep.subr.mxu0 0.0
        %1433 = vmatpush1.msra.mxu0 0.0
        %1434 = vmatprep.subr.mxu0 0.0
        %1435 = vmatpush1.msra.mxu0 0.0
        %1436 = vmatprep.subr.mxu0 0.0
        %1437 = vmatpush1.msra.mxu0 0.0
        %1438 = vmatprep.subr.mxu0 0.0
        %1439 = vmatpush1.msra.mxu0 0.0
        %1440 = vmatprep.subr.mxu0 0.0
        %1441 = vmatpush1.msra.mxu0 0.0
        %1442 = vmatprep.subr.mxu0 0.0
        %1443 = vmatpush1.msra.mxu0 0.0
        %1444 = vmatprep.subr.mxu0 0.0
        %1445 = vmatpush1.msra.mxu0 0.0
        %1446 = vmatprep.subr.mxu0 0.0
        %1447 = vmatpush1.msra.mxu0 0.0
        %1448 = vmatprep.subr.mxu0 0.0
        %1449 = vmatpush1.msra.mxu0 0.0
        %1450 = vmatprep.subr.mxu0 0.0
        %1451 = vmatpush1.msra.mxu0 0.0
        %1452 = vmatprep.subr.mxu0 0.0
        %1453 = vmatpush1.msra.mxu0 0.0
        %1454 = vmatprep.subr.mxu0 0.0
        %1455 = vmatpush1.msra.mxu0 0.0
        %1456 = vmatprep.subr.mxu0 0.0
        %1457 = vmatpush1.msra.mxu0 0.0
        %1458 = vmatprep.subr.mxu0 0.0
        %1459 = vmatpush1.msra.mxu0 0.0
        %1460 = vmatprep.subr.mxu0 0.0
        %1461 = vmatpush1.msra.mxu0 0.0
        %1462 = vmatprep.subr.mxu0 0.0
        %1463 = vmatpush1.msra.mxu0 0.0
        %1464 = vmatprep.subr.mxu0 0.0
        %1465 = vmatpush1.msra.mxu0 0.0
        %1466 = vmatprep.subr.mxu0 0.0
        %1467 = vmatpush1.msra.mxu0 0.0
        %1468 = vmatprep.subr.mxu0 0.0
        %1469 = vmatpush1.msra.mxu0 0.0
        %1470 = vmatprep.subr.mxu0 0.0
        %1471 = vmatpush1.msra.mxu0 0.0
        %1472 = vmatprep.subr.mxu0 0.0
        %1473 = vmatpush1.msra.mxu0 0.0
        %1474 = vmatprep.subr.mxu0 0.0
        %1475 = vmatpush1.msra.mxu0 0.0
        %1476 = vmatprep.subr.mxu0 0.0
        %1477 = vmatpush1.msra.mxu0 0.0
        %1478 = vmatprep.subr.mxu0 0.0
        %1479 = vmatpush1.msra.mxu0 0.0
        %1480 = vmatprep.subr.mxu0 0.0
        %1481 = vmatpush1.msra.mxu0 0.0
        %1482 = vmatprep.subr.mxu0 0.0
        %1483 = vmatpush1.msra.mxu0 0.0
        %1484 = vmatprep.subr.mxu0 0.0
        %1485 = vmatpush1.msra.mxu0 0.0
        %1486 = vmatprep.mubr.f32.mxu0 0.0
        %1487 = vmatmul.mubr.f32.gmra.mrb[0].mxu0 %v681
        %v1488 = vpop.f32.mrb[0].mxu0
        %v1489 = vadd.f32 0.0, %v1488
        %v1490 = vpop.f32.mrb[0].mxu0
        %1491 = vmatprep.mubr.f32.mxu0 0.0
        %1492 = vmatmul.mubr.f32.gmra.mrb[0].mxu0 %v684
        %v1493 = vpop.f32.mrb[0].mxu0
        %v1494 = vadd.f32 0.0, %v1493
        %v1495 = vpop.f32.mrb[0].mxu0
        %1496 = vdwg.mxu0
        %1497 = vmatprep.subr.mxu0 0.0
        %1498 = vmatpush1.msra.mxu0 %v591
        %1499 = vmatprep.subr.mxu0 0.0
        %1500 = vmatpush1.msra.mxu0 %v596
        %1501 = vmatprep.subr.mxu0 0.0
        %1502 = vmatpush1.msra.mxu0 0.0
        %1503 = vmatprep.subr.mxu0 0.0
        %1504 = vmatpush1.msra.mxu0 0.0
        %1505 = vmatprep.subr.mxu0 0.0
        %1506 = vmatpush1.msra.mxu0 0.0
        %1507 = vmatprep.subr.mxu0 0.0
        %1508 = vmatpush1.msra.mxu0 0.0
        %1509 = vmatprep.subr.mxu0 0.0
        %1510 = vmatpush1.msra.mxu0 0.0
        %1511 = vmatprep.subr.mxu0 0.0
        %1512 = vmatpush1.msra.mxu0 0.0
        %1513 = vmatprep.subr.mxu0 0.0
        %1514 = vmatpush1.msra.mxu0 0.0
        %1515 = vmatprep.subr.mxu0 0.0
        %1516 = vmatpush1.msra.mxu0 0.0
        %1517 = vmatprep.subr.mxu0 0.0
        %1518 = vmatpush1.msra.mxu0 0.0
        %1519 = vmatprep.subr.mxu0 0.0
        %1520 = vmatpush1.msra.mxu0 0.0
        %1521 = vmatprep.subr.mxu0 0.0
        %1522 = vmatpush1.msra.mxu0 0.0
        %1523 = vmatprep.subr.mxu0 0.0
        %1524 = vmatpush1.msra.mxu0 0.0
        %1525 = vmatprep.subr.mxu0 0.0
        %1526 = vmatpush1.msra.mxu0 0.0
        %1527 = vmatprep.subr.mxu0 0.0
        %1528 = vmatpush1.msra.mxu0 0.0
        %1529 = vmatprep.subr.mxu0 0.0
        %1530 = vmatpush1.msra.mxu0 0.0
        %1531 = vmatprep.subr.mxu0 0.0
        %1532 = vmatpush1.msra.mxu0 0.0
        %1533 = vmatprep.subr.mxu0 0.0
        %1534 = vmatpush1.msra.mxu0 0.0
        %1535 = vmatprep.subr.mxu0 0.0
        %1536 = vmatpush1.msra.mxu0 0.0
        %1537 = vmatprep.subr.mxu0 0.0
        %1538 = vmatpush1.msra.mxu0 0.0
        %1539 = vmatprep.subr.mxu0 0.0
        %1540 = vmatpush1.msra.mxu0 0.0
        %1541 = vmatprep.subr.mxu0 0.0
        %1542 = vmatpush1.msra.mxu0 0.0
        %1543 = vmatprep.subr.mxu0 0.0
        %1544 = vmatpush1.msra.mxu0 0.0
        %1545 = vmatprep.subr.mxu0 0.0
        %1546 = vmatpush1.msra.mxu0 0.0
        %1547 = vmatprep.subr.mxu0 0.0
        %1548 = vmatpush1.msra.mxu0 0.0
        %1549 = vmatprep.subr.mxu0 0.0
        %1550 = vmatpush1.msra.mxu0 0.0
        %1551 = vmatprep.subr.mxu0 0.0
        %1552 = vmatpush1.msra.mxu0 0.0
        %1553 = vmatprep.subr.mxu0 0.0
        %1554 = vmatpush1.msra.mxu0 0.0
        %1555 = vmatprep.subr.mxu0 0.0
        %1556 = vmatpush1.msra.mxu0 0.0
        %1557 = vmatprep.subr.mxu0 0.0
        %1558 = vmatpush1.msra.mxu0 0.0
        %1559 = vmatprep.subr.mxu0 0.0
        %1560 = vmatpush1.msra.mxu0 0.0
        %1561 = vmatprep.mubr.f32.mxu0 0.0
        %1562 = vmatmul.mubr.f32.gmra.mrb[0].mxu0 %v600
        %v1563 = vpop.f32.mrb[0].mxu0
        %v1564 = vadd.f32 %v1489, %v1563
        %v1565 = vpop.f32.mrb[0].mxu0
        %1566 = vmatprep.mubr.f32.mxu0 0.0
        %1567 = vmatmul.mubr.f32.gmra.mrb[0].mxu0 %v603
        %v1568 = vpop.f32.mrb[0].mxu0
        %v1569 = vadd.f32 %v1494, %v1568
        %v1570 = vpop.f32.mrb[0].mxu0
        %1571 = vdwg.mxu0
        %s1572 = scalar_lea.vmem %s357, 32 [#allocation11]
        %1573 = vst.msk [vmem:[%s1572] sm:$0xff] %vm390, %v1420
        %1574 = vst.msk [vmem:[%s1572 + $0x8] sm:$0xff] %vm390, %v1421
        %s1575 = scalar_lea.vmem %s364, 32 [#allocation12]
        %1576 = vst.msk [vmem:[%s1575] sm:$0xff] %vm390, %v1564
        %1577 = vst.msk [vmem:[%s1575 + $0x8] sm:$0xff] %vm390, %v1569
        %v1578 = vmul.f32 %v1420, %v1420
        %v1579 = vmul.f32 %v1421, %v1421
        %v1580 = vmul.f32 %v1564, %v1564
        %v1581 = vmul.f32 %v1569, %v1569
        %v1582 = vadd.f32 %v1578, %v1580
        %v1583 = vadd.f32 %v1579, %v1581
        %v1584 = vrsqrt.pop %v1582
        %v1585 = vmul.f32 %v1582, %v1584
        %vm1586 = vcmp.eq.f32.partialorder %v1582, inf
        %v1587 = vsel %vm1586, %v1582, %v1585
        %vm1588 = vcmp.eq.f32.partialorder %v1582, 0.0
        %v1589 = vand.u32 %v1582, 2147483648
        %v1590 = vsel %vm1588, %v1589, %v1587
        %v1591 = vrsqrt.pop %v1583
        %v1592 = vmul.f32 %v1583, %v1591
        %vm1593 = vcmp.eq.f32.partialorder %v1583, inf
        %v1594 = vsel %vm1593, %v1583, %v1592
        %vm1595 = vcmp.eq.f32.partialorder %v1583, 0.0
        %v1596 = vand.u32 %v1583, 2147483648
        %v1597 = vsel %vm1595, %v1596, %v1594
        %s1598 = scalar_lea.vmem %s371, 32 [#allocation14]
        %1599 = vst.msk [vmem:[%s1598] sm:$0xff] %vm390, %v1590
        %1600 = vst.msk [vmem:[%s1598 + $0x8] sm:$0xff] %vm390, %v1597
        %s1601 = sand.u32 %s146, 1
        %s1602 = scalar_lea.sflag [#allocation4], %s1601
        %s1603 = sand.u32 %s146, 1
        %s1604 = smul.addr %s1603, 48
        %s1605 = scalar_lea.vmem [#allocation11], %s1604
        %s1606 = sand.u32 %s28, 1
        %s1607 = scalar_lea.sflag [#allocation13], %s1606
        %s1608 = sand.u32 %s172, 1
        %s1609 = smul.addr %s1608, 48
        %s1610 = scalar_lea.vmem [#allocation12], %s1609
        %s1611 = sand.u32 %s28, 1
        %s1612 = scalar_lea.sflag [#allocation13], %s1611
        %s1613 = sand.u32 %s198, 1
        %s1614 = smul.addr %s1613, 48
        %s1615 = scalar_lea.vmem [#allocation14], %s1614
        // Predicated region
        $region61: #{tpu_custom_call.1} parent=39 // pred_check
          %p1616 = pneg %p156
        $region62: #{tpu_custom_call.1} parent=39 // pred_check_branch
          %1618 = sbr.rel (%p1616) target = $region64
        $region63: #{tpu_custom_call.1} parent=39 // pred_region
          %s1619 = smul.u32 3, %s28
          %s1621 = ssub.s32 768, 768
          %1622 = vsyncadd %s1602, %s1621
          %s1623 = smul.addr %s1619, 2
          %s1624 = smul.addr %s1623, 128
          %s1625 = scalar_lea.hbm %s5, %s1624
          %s1626 = sshll.u32 %s1605, 4
          %s1627 = int_to_ptr.vmem [resolvable:$true] %s1626
          %1632 = dma.vmem_to_hbm [thread:$0]  %s1627, 768, %s1625, %s1602, 128, 128, 8
        $region64: #{tpu_custom_call.1} parent=39 // pred_fallthru
          _
        // Predicated region
        $region65: #{tpu_custom_call.1} parent=39 // pred_check
          %p1633 = pneg %p182
        $region66: #{tpu_custom_call.1} parent=39 // pred_check_branch
          %1635 = sbr.rel (%p1633) target = $region68
        $region67: #{tpu_custom_call.1} parent=39 // pred_region
          %s1636 = smul.u32 3, %s28
          %s1638 = ssub.s32 768, 768
          %1639 = vsyncadd %s1607, %s1638
          %s1640 = smul.addr %s1636, 2
          %s1641 = smul.addr %s1640, 128
          %s1642 = scalar_lea.hbm %s6, %s1641
          %s1643 = sshll.u32 %s1610, 4
          %s1644 = int_to_ptr.vmem [resolvable:$true] %s1643
          %1649 = dma.vmem_to_hbm [thread:$0]  %s1644, 768, %s1642, %s1607, 128, 128, 8
        $region68: #{tpu_custom_call.1} parent=39 // pred_fallthru
          _
        // Predicated region
        $region69: #{tpu_custom_call.1} parent=39 // pred_check
          %p1650 = pneg %p208
        $region70: #{tpu_custom_call.1} parent=39 // pred_check_branch
          %1652 = sbr.rel (%p1650) target = $region72
        $region71: #{tpu_custom_call.1} parent=39 // pred_region
          %s1653 = smul.u32 3, %s28
          %s1655 = ssub.s32 768, 768
          %1656 = vsyncadd %s1612, %s1655
          %s1657 = smul.addr %s1653, 2
          %s1658 = smul.addr %s1657, 128
          %s1659 = scalar_lea.hbm %s7, %s1658
          %s1660 = sshll.u32 %s1615, 4
          %s1661 = int_to_ptr.vmem [resolvable:$true] %s1660
          %1666 = dma.vmem_to_hbm [thread:$0]  %s1661, 768, %s1659, %s1612, 128, 128, 8
        $region72: #{tpu_custom_call.1} parent=39 // pred_fallthru
          _
      $region40: #{tpu_custom_call.1} parent=5 // pred_fallthru
        _
      %p1667 = scmp.le.s32.totalorder 2, %s23
      // Predicated region
      $region73: #{tpu_custom_call.1} parent=5 // pred_check
        %p1668 = pneg %p1667
      $region74: #{tpu_custom_call.1} parent=5 // pred_check_branch
        %1670 = sbr.rel (%p1668) target = $region76
      $region75: #{tpu_custom_call.1} parent=5 // pred_region
        %s1671 = ssub.s32 %s23, 2
        // Predicated region
        $region77: #{tpu_custom_call.1} parent=75 // pred_check
          %p1672 = pneg %p162
        $region78: #{tpu_custom_call.1} parent=75 // pred_check_branch
          %1674 = sbr.rel (%p1672) target = $region80
        $region79: #{tpu_custom_call.1} parent=75 // pred_region
          %s1675 = sand.u32 %s147, 1
          %s1676 = scalar_lea.sflag [#allocation4], %s1675
          %s1677 = sand.u32 %s147, 1
          %s1678 = smul.addr %s1677, 48
          %s1679 = scalar_lea.vmem [#allocation11], %s1678
          %1680 = dma.done %s1676, 768
        $region80: #{tpu_custom_call.1} parent=75 // pred_fallthru
          _
        // Predicated region
        $region81: #{tpu_custom_call.1} parent=75 // pred_check
          %p1681 = pneg %p188
        $region82: #{tpu_custom_call.1} parent=75 // pred_check_branch
          %1683 = sbr.rel (%p1681) target = $region84
        $region83: #{tpu_custom_call.1} parent=75 // pred_region
          %s1684 = sand.u32 %s29, 1
          %s1685 = scalar_lea.sflag [#allocation13], %s1684
          %s1686 = sand.u32 %s173, 1
          %s1687 = smul.addr %s1686, 48
          %s1688 = scalar_lea.vmem [#allocation12], %s1687
          %1689 = dma.done %s1685, 768
        $region84: #{tpu_custom_call.1} parent=75 // pred_fallthru
          _
        // Predicated region
        $region85: #{tpu_custom_call.1} parent=75 // pred_check
          %p1690 = pneg %p214
        $region86: #{tpu_custom_call.1} parent=75 // pred_check_branch
          %1692 = sbr.rel (%p1690) target = $region88
        $region87: #{tpu_custom_call.1} parent=75 // pred_region
          %s1693 = sand.u32 %s29, 1
          %s1694 = scalar_lea.sflag [#allocation13], %s1693
          %s1695 = sand.u32 %s199, 1
          %s1696 = smul.addr %s1695, 48
          %s1697 = scalar_lea.vmem [#allocation14], %s1696
          %1698 = dma.done %s1694, 768
        $region88: #{tpu_custom_call.1} parent=75 // pred_fallthru
          _
      $region76: #{tpu_custom_call.1} parent=5 // pred_fallthru
        _
    $region6: #{tpu_custom_call.1} parent=1 // loop_footer
      %s27 = sadd.s32 1, %s23
    $region7: #{tpu_custom_call.1} parent=1 // loop_footer_branch
      %22 = sbr.rel target = $region3
    $region8: #{tpu_custom_call.1} parent=1 // loop_exit
      _
    %1699 = vsyncpa [#allocation3], 1
    %s1700 = scalar_lea.sflag [#allocation3], 1
    %1701 = vsyncpa %s1700, 1
    %1702 = vsyncpa [#allocation6], 1
    %1703 = vsyncpa [#allocation9], 1
    %1704 = vsyncpa [#allocation4], 1
    %s1705 = scalar_lea.sflag [#allocation4], 1
    %1706 = vsyncpa %s1705, 1
    %1707 = vsyncpa [#allocation13], 1
    %s1708 = scalar_lea.sflag [#allocation13], 1
    %1709 = vsyncpa %s1708, 1

</llo_original>
